<compile_context>
chip_gen: v6e
topology: v6e:2x2x1
jax: 0.10.0
libtpu: 0.0.40
codegen_flags: <defaults>
</compile_context>

<pallas_src>
import functools

import jax
import jax.numpy as jnp
from jax.experimental import pallas as pl
from jax.experimental.pallas import tpu as pltpu


CFG = dict(
    vocab=100,            # code-dict size
    E=128,                # embedding / encoder channels
    D=128,                # decoder LSTM dim
    A=128,                # attention dim
    P=128,                # prenet dim
    n_mel=80,             # mel channels
    out_pad=128,          # lane-dense decoder output width (mel | gate | zero pad)
    enc_kernel=5,         # encoder conv kernel
    max_decoder_steps=32, # fixed decoder length (small for the demo)
    n_flows=2,            # WaveGlow flows
    n_group=8,            # WaveGlow sample grouping
    hop=16,               # audio samples per mel frame
    wg_tile=32,           # WaveGlow time-tile (lane axis) for the Pallas grid
    stft_frame=128,       # denoiser DFT frame size
    denoiser_frame_tile=256,
    denoiser_strength=0.1,
)


def _vmem_spec():
    return pl.BlockSpec(memory_space=pltpu.MemorySpace.VMEM)


# ----------------------------------------------------------------------------
# Kernel 1: fused matmul + bias + activation (used for im2col Conv1d).
#   x_col: [T, K*C_in], w_col: [K*C_in, C_out], b: [1, C_out]
# ----------------------------------------------------------------------------
def _matmul_bias_act_kernel(x_ref, w_ref, b_ref, o_ref, *, activation):
    acc = jnp.dot(x_ref[...], w_ref[...], preferred_element_type=jnp.float32)
    acc = acc + b_ref[...]
    if activation == "relu":
        acc = jax.nn.relu(acc)
    elif activation == "tanh":
        acc = jnp.tanh(acc)
    o_ref[...] = acc.astype(o_ref.dtype)


def conv1d_same(x, w_col, b, activation="linear"):
    """Conv1d with 'same' padding via im2col: one MXU matmul with K*C_in contraction."""
    T, C_in = x.shape
    K = w_col.shape[0] // C_in
    pad = K // 2
    xp = jnp.pad(x, ((pad, K - 1 - pad), (0, 0)))
    # im2col (wrapper-side layout plumbing): [T, K*C_in]
    x_col = jnp.concatenate([xp[k:k + T, :] for k in range(K)], axis=-1)
    kernel = functools.partial(_matmul_bias_act_kernel, activation=activation)
    return pl.pallas_call(
        kernel,
        out_shape=jax.ShapeDtypeStruct((T, w_col.shape[1]), jnp.float32),
        in_specs=[_vmem_spec(), _vmem_spec(), _vmem_spec()],
        out_specs=_vmem_spec(),
    )(x_col, w_col, b)


# ----------------------------------------------------------------------------
# Kernel 2: Tacotron2-style autoregressive decoder.
#   prenet -> attention LSTM -> additive attention -> decoder LSTM -> fused mel/gate.
# Weights stay as Refs (read at point of use), outputs are one lane-dense 128-wide
# row per step (mel lanes 0:n_mel, gate lane n_mel).
# ----------------------------------------------------------------------------
def _decoder_kernel(mem_ref, wmem_ref, wq_ref, v_ref,
                    wp1_ref, wp2_ref,
                    wih_ap_ref, wih_ac_ref, whh_a_ref, ba_ref,
                    wih_dh_ref, wih_dc_ref, whh_d_ref, bd_ref,
                    wout_h_ref, wout_c_ref, bout_ref,
                    out_ref, *, n_steps, D, E, OUT_W):
    memory = mem_ref[...]                                                   # [T_in, E] (small)
    proc_mem = jnp.dot(memory, wmem_ref[...],
                       preferred_element_type=jnp.float32)                  # [T_in, A]

    def lstm_gates(g, c):
        i_g, f_g, g_g, o_g = jnp.split(g, 4, axis=-1)
        c_new = jax.nn.sigmoid(f_g) * c + jax.nn.sigmoid(i_g) * jnp.tanh(g_g)
        h_new = jax.nn.sigmoid(o_g) * jnp.tanh(c_new)
        return h_new, c_new

    def step(t, carry):
        h_a, c_a, h_d, c_d, ctx, prev_out = carry
        # prenet (dropout omitted at inference); prev_out is the padded [1, OUT_W] frame,
        # Wp1 rows >= n_mel are zero so gate/pad lanes contribute nothing.
        p = jax.nn.relu(jnp.dot(prev_out, wp1_ref[...],
                                preferred_element_type=jnp.float32))
        p = jax.nn.relu(jnp.dot(p, wp2_ref[...],
                                preferred_element_type=jnp.float32))
        # attention LSTM -- split-weight matmuls instead of lane concat
        g_a = (jnp.dot(p, wih_ap_ref[...], preferred_element_type=jnp.float32)
               + jnp.dot(ctx, wih_ac_ref[...], preferred_element_type=jnp.float32)
               + jnp.dot(h_a, whh_a_ref[...], preferred_element_type=jnp.float32)
               + ba_ref[...])
        h_a, c_a = lstm_gates(g_a, c_a)
        # additive (Bahdanau) attention: energy via VPU multiply + lane reduce (no N=1 matmul)
        q = jnp.dot(h_a, wq_ref[...], preferred_element_type=jnp.float32)   # [1, A]
        e = jnp.sum(jnp.tanh(proc_mem + q) * v_ref[...],
                    axis=-1, keepdims=True)                                 # [T_in, 1]
        attn = jax.nn.softmax(e, axis=0)
        ctx = jnp.sum(attn * memory, axis=0, keepdims=True)                 # [1, E]
        # decoder LSTM -- split-weight matmuls
        g_d = (jnp.dot(h_a, wih_dh_ref[...], preferred_element_type=jnp.float32)
               + jnp.dot(ctx, wih_dc_ref[...], preferred_element_type=jnp.float32)
               + jnp.dot(h_d, whh_d_ref[...], preferred_element_type=jnp.float32)
               + bd_ref[...])
        h_d, c_d = lstm_gates(g_d, c_d)
        # fused mel+gate projection -> one lane-dense 128-wide row
        row = (jnp.dot(h_d, wout_h_ref[...], preferred_element_type=jnp.float32)
               + jnp.dot(ctx, wout_c_ref[...], preferred_element_type=jnp.float32)
               + bout_ref[...])                                             # [1, OUT_W]
        out_ref[pl.ds(t, 1), :] = row.astype(out_ref.dtype)
        return (h_a, c_a, h_d, c_d, ctx, row)

    init = (jnp.zeros((1, D), jnp.float32), jnp.zeros((1, D), jnp.float32),
            jnp.zeros((1, D), jnp.float32), jnp.zeros((1, D), jnp.float32),
            jnp.zeros((1, E), jnp.float32), jnp.zeros((1, OUT_W), jnp.float32))
    jax.lax.fori_loop(0, n_steps, step, init, unroll=2)
    # TODO(synk): stop-token (has_eos) early termination is data-dependent and not
    # expressible with a static output shape; a fixed number of steps is produced.


def run_decoder(memory, params, cfg):
    n_steps = cfg["max_decoder_steps"]
    OUT_W = cfg["out_pad"]
    kernel = functools.partial(_decoder_kernel, n_steps=n_steps,
                               D=cfg["D"], E=cfg["E"], OUT_W=OUT_W)
    out = pl.pallas_call(
        kernel,
        out_shape=jax.ShapeDtypeStruct((n_steps, OUT_W), jnp.float32),
        in_specs=[_vmem_spec()] * 17,
        out_specs=_vmem_spec(),
    )(memory, params["W_mem"], params["W_query"], params["v_att"],
      params["Wp1"], params["Wp2"],
      params["Wih_a_p"], params["Wih_a_c"], params["Whh_a"], params["b_a"],
      params["Wih_d_h"], params["Wih_d_c"], params["Whh_d"], params["b_d"],
      params["W_out_h"], params["W_out_c"], params["b_out"])
    return out   # [n_steps, OUT_W]: mel in lanes :n_mel, gate in lane n_mel


# ----------------------------------------------------------------------------
# Kernel 3: WaveGlow-style inverse flow (infer direction), channel-major layout.
#   z: [n_group, TG] grouped noise tile, condp: [128, TG] zero-padded conditioning
#   (cond in sublanes half : half+n_mel).  The coupling split is a sublane split,
#   the WN gated dense is W[H,128] @ h[128,TG] (M=128, K=128), output is [n_group, TG].
# ----------------------------------------------------------------------------
def _waveglow_kernel(z_ref, condp_ref, w1x1_ref, wt_ref, bt_ref, ws_ref, bs_ref,
                     wo_ref, bo_ref, o_ref, h_buf, *, n_flows, n_group):
    half = n_group // 2
    h_buf[...] = condp_ref[...]                 # [128, TG]; rows 0:half are zero
    z = z_ref[...]                              # [n_group, TG]
    for f in range(n_flows - 1, -1, -1):        # infer runs flows in reverse order
        z0 = z[:half, :]
        z1 = z[half:, :]
        h_buf[0:half, :] = z0                   # sublane update; rows >= half keep cond/zeros
        h = h_buf[...]                          # [128, TG], contraction padded to 128
        acts = (jnp.tanh(jnp.dot(wt_ref[f], h, preferred_element_type=jnp.float32)
                         + bt_ref[f])
                * jax.nn.sigmoid(jnp.dot(ws_ref[f], h, preferred_element_type=jnp.float32)
                                 + bs_ref[f]))                       # [H, TG]
        out = jnp.dot(wo_ref[f], acts, preferred_element_type=jnp.float32) + bo_ref[f]
        log_s = out[:half, :]
        b = out[half:, :]
        z1 = (z1 - b) * jnp.exp(-log_s)         # affine coupling inverse
        z = jnp.concatenate([z0, z1], axis=0)   # sublane concat
        z = jnp.dot(w1x1_ref[f], z, preferred_element_type=jnp.float32)  # 1x1 channel mix
    o_ref[...] = z.astype(o_ref.dtype)


def waveglow_infer(mel, params, cfg, sigma, noise_key):
    hop, n_group, n_mel = cfg["hop"], cfg["n_group"], cfg["n_mel"]
    half = n_group // 2
    K_PAD = 128
    T_mel = mel.shape[0]
    L = T_mel * hop
    Tg = L // n_group
    TG = min(cfg["wg_tile"], Tg)
    assert Tg % TG == 0
    n_tiles = Tg // TG

    # channel-major noise and conditioning
    z = sigma * jax.random.normal(noise_key, (n_group, Tg), dtype=jnp.float32)
    cond = jnp.repeat(mel, hop // n_group, axis=0).T                       # [n_mel, Tg]
    condp = jnp.zeros((K_PAD, Tg), jnp.float32).at[half:half + n_mel, :].set(cond)

    # present as [n_tiles, C, TG] so each grid step's block spans full lane extent
    z3 = z.reshape(n_group, n_tiles, TG).transpose(1, 0, 2)
    c3 = condp.reshape(K_PAD, n_tiles, TG).transpose(1, 0, 2)

    kernel = functools.partial(_waveglow_kernel, n_flows=cfg["n_flows"], n_group=n_group)

    def full(shape):
        return pl.BlockSpec(shape, lambda i: (0,) * len(shape))

    out = pl.pallas_call(
        kernel,
        out_shape=jax.ShapeDtypeStruct((n_tiles, n_group, TG), jnp.float32),
        grid=(n_tiles,),
        in_specs=[pl.BlockSpec((None, n_group, TG), lambda i: (i, 0, 0)),
                  pl.BlockSpec((None, K_PAD, TG), lambda i: (i, 0, 0)),
                  full(params["wg_w1x1"].shape),
                  full(params["wg_wt"].shape), full(params["wg_bt"].shape),
                  full(params["wg_ws"].shape), full(params["wg_bs"].shape),
                  full(params["wg_wo"].shape), full(params["wg_bo"].shape)],
        out_specs=pl.BlockSpec((None, n_group, TG), lambda i: (i, 0, 0)),
        scratch_shapes=[pltpu.VMEM((K_PAD, TG), jnp.float32)],
        compiler_params=pltpu.CompilerParams(dimension_semantics=("parallel",)),
    )(z3, c3, params["wg_w1x1"], params["wg_wt"], params["wg_bt"],
      params["wg_ws"], params["wg_bs"], params["wg_wo"], params["wg_bo"])

    # out[i, g, j] = z[g, i*TG + j]  ->  audio[t*n_group + g] (layout plumbing in wrapper)
    return out.transpose(0, 2, 1).reshape(L)


# ----------------------------------------------------------------------------
# Kernel 4: Denoiser -- spectral subtraction via packed DFT matmuls.
#   dft_pack = [dft_re | dft_im]  ([F, 2F]),  idft_pack = [idft_re ; idft_im] ([2F, F]).
# TODO(synk): overlap-add windowed STFT replaced by non-overlapping rectangular frames.
# ----------------------------------------------------------------------------
def _denoiser_kernel(frames_ref, dft_ref, idft_ref, bias_ref, o_ref, *, strength, F):
    x = frames_ref[...]
    spec = jnp.dot(x, dft_ref[...], preferred_element_type=jnp.float32)    # [M, 2F]
    re = spec[:, :F]
    im = spec[:, F:]
    mag = jnp.sqrt(re * re + im * im + 1e-12)
    mag_dn = jax.nn.relu(mag - strength * bias_ref[...])
    scale = mag_dn * pl.reciprocal(mag + 1e-8, approx=True)
    spec_dn = jnp.concatenate([re * scale, im * scale], axis=-1)           # vreg-aligned concat
    y = jnp.dot(spec_dn, idft_ref[...], preferred_element_type=jnp.float32)
    o_ref[...] = y.astype(o_ref.dtype)


def denoise(audio, params, cfg, strength):
    F = cfg["stft_frame"]
    n_frames = audio.shape[0] // F
    frames = audio[: n_frames * F].reshape(n_frames, F)
    FT = cfg["denoiser_frame_tile"]
    tile = FT if (n_frames % FT == 0) else n_frames
    grid = (n_frames // tile,)

    def const(shape):
        return pl.BlockSpec(shape, lambda i: (0,) * len(shape))

    kernel = functools.partial(_denoiser_kernel, strength=strength, F=F)
    out = pl.pallas_call(
        kernel,
        out_shape=jax.ShapeDtypeStruct((n_frames, F), jnp.float32),
        grid=grid,
        in_specs=[pl.BlockSpec((tile, F), lambda i: (i, 0)),
                  const(params["dft_pack"].shape),
                  const(params["idft_pack"].shape),
                  const(params["bias_spec"].shape)],
        out_specs=pl.BlockSpec((tile, F), lambda i: (i, 0)),
        compiler_params=pltpu.CompilerParams(dimension_semantics=("parallel",)),
    )(frames, params["dft_pack"], params["idft_pack"], params["bias_spec"])
    return out.reshape(-1)


# ----------------------------------------------------------------------------
# Full forward (mirrors TacotronVocoder.forward / synthesize_audio)
# ----------------------------------------------------------------------------
def tacotron_vocoder_forward(units, params, cfg):
    # -- Tacotron2.inference --
    emb = params["embedding"][units]                     # [T_in, E] symbol embedding
    x = emb
    for i in range(3):                                   # encoder conv stack (im2col matmuls)
        x = conv1d_same(x, params[f"enc_conv{i}_w"], params[f"enc_conv{i}_b"], "relu")
    # TODO(synk): encoder bidirectional LSTM omitted (conv stack only).
    memory = x
    dec_out = run_decoder(memory, params, cfg)           # [n_steps, 128] (mel | gate | pad)
    # postnet residual, kept 128-lane padded end-to-end (pad/gate lanes have zero weights)
    p = conv1d_same(dec_out, params["post_conv0_w"], params["post_conv0_b"], "tanh")
    p = conv1d_same(p, params["post_conv1_w"], params["post_conv1_b"], "linear")
    mel_post = (dec_out + p)[:, :cfg["n_mel"]]           # strip gate/pad lanes (wrapper slice)

    # -- waveglow.infer(mel.float(), sigma=0.666) --
    audio = waveglow_infer(mel_post, params, cfg, sigma=0.666,
                           noise_key=jax.random.PRNGKey(123))

    # -- denoiser(aud, strength=denoiser_strength).squeeze(1)[0] --
    aud_dn = denoise(audio, params, cfg, strength=cfg["denoiser_strength"])
    return aud_dn


# ----------------------------------------------------------------------------
# Deterministic parameter init (synthetic stand-in for the checkpoints)
# ----------------------------------------------------------------------------
def init_params(key, cfg):
    E, D, A, P, n_mel = cfg["E"], cfg["D"], cfg["A"], cfg["P"], cfg["n_mel"]
    OUT_W = cfg["out_pad"]
    K = cfg["enc_kernel"]
    n_flows, n_group = cfg["n_flows"], cfg["n_group"]
    half = n_group // 2
    H = 128
    K_PAD = 128
    keys = iter(jax.random.split(key, 64))

    def w(shape, fan_in):
        return jax.random.normal(next(keys), shape, jnp.float32) / jnp.sqrt(float(fan_in))

    p = {}
    p["embedding"] = 0.3 * jax.random.normal(next(keys), (cfg["vocab"], E), jnp.float32)

    # encoder convs -> im2col weights [K*C_in, C_out]
    for i in range(3):
        p[f"enc_conv{i}_w"] = w((K, E, E), K * E).reshape(K * E, E)
        p[f"enc_conv{i}_b"] = jnp.zeros((1, E), jnp.float32)

    # postnet convs, 128-lane padded: conv0 ignores gate/pad input lanes,
    # conv1 writes only mel output lanes (so the residual add is exact).
    w0 = w((K, OUT_W, OUT_W), K * n_mel).at[:, n_mel:, :].set(0.0)
    p["post_conv0_w"] = w0.reshape(K * OUT_W, OUT_W)
    p["post_conv0_b"] = jnp.zeros((1, OUT_W), jnp.float32)
    w1 = w((K, OUT_W, OUT_W), K * OUT_W).at[:, :, n_mel:].set(0.0)
    p["post_conv1_w"] = w1.reshape(K * OUT_W, OUT_W)
    p["post_conv1_b"] = jnp.zeros((1, OUT_W), jnp.float32)

    # decoder / attention
    p["W_mem"] = w((E, A), E)
    p["W_query"] = w((D, A), D)
    p["v_att"] = w((1, A), A)
    p["Wp1"] = w((OUT_W, P), n_mel).at[n_mel:, :].set(0.0)   # prenet reads padded prev frame
    p["Wp2"] = w((P, P), P)
    p["Wih_a_p"] = w((P, 4 * D), P + E)
    p["Wih_a_c"] = w((E, 4 * D), P + E)
    p["Whh_a"] = w((D, 4 * D), D)
    p["b_a"] = jnp.zeros((1, 4 * D), jnp.float32)
    p["Wih_d_h"] = w((D, 4 * D), D + E)
    p["Wih_d_c"] = w((E, 4 * D), D + E)
    p["Whh_d"] = w((D, 4 * D), D)
    p["b_d"] = jnp.zeros((1, 4 * D), jnp.float32)
    # fused mel+gate projection: lanes [0:n_mel)=mel, lane n_mel=gate, rest zero
    p["W_out_h"] = w((D, OUT_W), D + E).at[:, n_mel + 1:].set(0.0)
    p["W_out_c"] = w((E, OUT_W), D + E).at[:, n_mel + 1:].set(0.0)
    p["b_out"] = jnp.zeros((1, OUT_W), jnp.float32)

    # WaveGlow flows -- channel-major weights used directly in the inverse/infer direction
    p["wg_w1x1"] = jnp.stack([jnp.eye(n_group, dtype=jnp.float32)
                              + 0.01 * jax.random.normal(next(keys), (n_group, n_group), jnp.float32)
                              for _ in range(n_flows)])
    # WN gated dense: W[H, K_PAD] @ h[K_PAD, TG]; only first half+n_mel input columns are real
    p["wg_wt"] = w((n_flows, H, K_PAD), half + n_mel).at[:, :, half + n_mel:].set(0.0)
    p["wg_ws"] = w((n_flows, H, K_PAD), half + n_mel).at[:, :, half + n_mel:].set(0.0)
    p["wg_bt"] = 0.1 * jax.random.normal(next(keys), (n_flows, H, 1), jnp.float32)
    p["wg_bs"] = 0.1 * jax.random.normal(next(keys), (n_flows, H, 1), jnp.float32)
    p["wg_wo"] = 0.1 * w((n_flows, n_group, H), H)
    p["wg_bo"] = 0.01 * jax.random.normal(next(keys), (n_flows, n_group, 1), jnp.float32)

    # Denoiser DFT/IDFT bases, packed for fused analysis/synthesis matmuls
    F = cfg["stft_frame"]
    n = jnp.arange(F, dtype=jnp.float32)
    ang = 2.0 * jnp.pi * jnp.outer(n, n) / F
    dft_re, dft_im = jnp.cos(ang), -jnp.sin(ang)
    idft_re, idft_im = jnp.cos(ang) / F, -jnp.sin(ang) / F
    p["dft_pack"] = jnp.concatenate([dft_re, dft_im], axis=1)    # [F, 2F]
    p["idft_pack"] = jnp.concatenate([idft_re, idft_im], axis=0)  # [2F, F]

    # Denoiser bias spectrum: |STFT(waveglow(zero mel, sigma=0))| averaged over frames
    mel_zeros = jnp.zeros((cfg["max_decoder_steps"], n_mel), jnp.float32)
    bias_audio = waveglow_infer(mel_zeros, p, cfg, sigma=0.0,
                                noise_key=jax.random.PRNGKey(1))
    frames = bias_audio.reshape(-1, F)
    re = frames @ dft_re
    im = frames @ dft_im
    p["bias_spec"] = jnp.mean(jnp.sqrt(re * re + im * im), axis=0, keepdims=True)
    return p


if __name__ == "__main__":
    params = init_params(jax.random.PRNGKey(0), CFG)
    # "units" input: discrete speech codes (what tts_dataset.get_tensor produces)
    units = jax.random.randint(jax.random.PRNGKey(0), (16,), 0, CFG["vocab"], dtype=jnp.int32)

    fwd = jax.jit(lambda u: tacotron_vocoder_forward(u, params, CFG))
    out_audio = fwd(units)
    jax.block_until_ready(out_audio)

    expected_len = CFG["max_decoder_steps"] * CFG["hop"]
    assert out_audio.shape == (expected_len,), out_audio.shape
    assert bool(jnp.all(jnp.isfinite(out_audio)))
    print("KERNEL_OK")
</pallas_src>

<mosaic_0001>
module attributes {stable_mosaic.version = 11 : i64} {
  func.func @_waveglow_kernel(%arg0: i32, %arg1: memref<1x8x32xf32, #tpu.memory_space<vmem>>, %arg2: memref<1x128x32xf32, #tpu.memory_space<vmem>>, %arg3: memref<2x8x8xf32, #tpu.memory_space<vmem>>, %arg4: memref<2x128x128xf32, #tpu.memory_space<vmem>>, %arg5: memref<2x128x1xf32, #tpu.memory_space<vmem>>, %arg6: memref<2x128x128xf32, #tpu.memory_space<vmem>>, %arg7: memref<2x128x1xf32, #tpu.memory_space<vmem>>, %arg8: memref<2x8x128xf32, #tpu.memory_space<vmem>>, %arg9: memref<2x8x1xf32, #tpu.memory_space<vmem>>, %arg10: memref<1x8x32xf32, #tpu.memory_space<vmem>>, %arg11: memref<128x32xf32, #tpu.memory_space<vmem>>) attributes {dimension_semantics = [#tpu.dimension_semantics<parallel>], iteration_bounds = array<i64: 2>, scalar_prefetch = 0 : i64, scratch_operands = 1 : i64, tpu.core_type = #tpu.core_type<tc>, window_params = [{transform_indices = @transform_0, window_bounds = array<i64: 1, 8, 32>}, {transform_indices = @transform_1, window_bounds = array<i64: 1, 128, 32>}, {pipeline_mode = #tpu.pipeline_mode<synchronous>, transform_indices = @transform_2, window_bounds = array<i64: 2, 8, 8>}, {pipeline_mode = #tpu.pipeline_mode<synchronous>, transform_indices = @transform_3, window_bounds = array<i64: 2, 128, 128>}, {pipeline_mode = #tpu.pipeline_mode<synchronous>, transform_indices = @transform_4, window_bounds = array<i64: 2, 128, 1>}, {pipeline_mode = #tpu.pipeline_mode<synchronous>, transform_indices = @transform_5, window_bounds = array<i64: 2, 128, 128>}, {pipeline_mode = #tpu.pipeline_mode<synchronous>, transform_indices = @transform_6, window_bounds = array<i64: 2, 128, 1>}, {pipeline_mode = #tpu.pipeline_mode<synchronous>, transform_indices = @transform_7, window_bounds = array<i64: 2, 8, 128>}, {pipeline_mode = #tpu.pipeline_mode<synchronous>, transform_indices = @transform_8, window_bounds = array<i64: 2, 8, 1>}, {transform_indices = @transform_9, window_bounds = array<i64: 1, 8, 32>}]} {
    %c0 = arith.constant 0 : index
    %c0_0 = arith.constant 0 : index
    %c0_1 = arith.constant 0 : index
    %0 = vector.load %arg2[%c0, %c0_0, %c0_1] : memref<1x128x32xf32, #tpu.memory_space<vmem>>, vector<1x128x32xf32>
    %1 = vector.shape_cast %0 : vector<1x128x32xf32> to vector<128x32xf32>
    %c0_2 = arith.constant 0 : index
    %c0_3 = arith.constant 0 : index
    %2 = vector.load %arg11[%c0_2, %c0_3] : memref<128x32xf32, #tpu.memory_space<vmem>>, vector<128x32xf32>
    tpu.vector_store %arg11[%c0_2, %c0_3], %1 {strides = array<i32>} : memref<128x32xf32, #tpu.memory_space<vmem>>, vector<128x32xf32>,
    %c0_4 = arith.constant 0 : index
    %c0_5 = arith.constant 0 : index
    %c0_6 = arith.constant 0 : index
    %3 = vector.load %arg1[%c0_4, %c0_5, %c0_6] : memref<1x8x32xf32, #tpu.memory_space<vmem>>, vector<1x8x32xf32>
    %4 = vector.shape_cast %3 : vector<1x8x32xf32> to vector<8x32xf32>
    %5 = vector.extract_strided_slice %4 {offsets = [0, 0], sizes = [4, 32], strides = [1, 1]} : vector<8x32xf32> to vector<4x32xf32>
    %6 = vector.extract_strided_slice %4 {offsets = [4, 0], sizes = [4, 32], strides = [1, 1]} : vector<8x32xf32> to vector<4x32xf32>
    %c0_7 = arith.constant 0 : index
    %c0_8 = arith.constant 0 : index
    %7 = vector.load %arg11[%c0_7, %c0_8] : memref<128x32xf32, #tpu.memory_space<vmem>>, vector<4x32xf32>
    tpu.vector_store %arg11[%c0_7, %c0_8], %5 {strides = array<i32>} : memref<128x32xf32, #tpu.memory_space<vmem>>, vector<4x32xf32>,
    %c0_9 = arith.constant 0 : index
    %c0_10 = arith.constant 0 : index
    %8 = vector.load %arg11[%c0_9, %c0_10] : memref<128x32xf32, #tpu.memory_space<vmem>>, vector<128x32xf32>
    %c1 = arith.constant 1 : index
    %c0_11 = arith.constant 0 : index
    %c0_12 = arith.constant 0 : index
    %9 = vector.load %arg4[%c1, %c0_11, %c0_12] : memref<2x128x128xf32, #tpu.memory_space<vmem>>, vector<1x128x128xf32>
    %10 = vector.shape_cast %9 : vector<1x128x128xf32> to vector<128x128xf32>
    %cst = arith.constant dense<0.000000e+00> : vector<128x32xf32>
    %11 = tpu.matmul %10, %8, %cst {dimension_numbers = #tpu.dot_dimension_numbers<[1], [0], [0], [1], [0, 0, 1, 1], [], []>} : vector<128x128xf32>, vector<128x32xf32>, vector<128x32xf32> -> vector<128x32xf32>
    %c1_13 = arith.constant 1 : index
    %c0_14 = arith.constant 0 : index
    %c0_15 = arith.constant 0 : index
    %12 = vector.load %arg5[%c1_13, %c0_14, %c0_15] : memref<2x128x1xf32, #tpu.memory_space<vmem>>, vector<1x128x1xf32>
    %13 = vector.shape_cast %12 : vector<1x128x1xf32> to vector<128x1xf32>
    %14 = vector.broadcast %13 : vector<128x1xf32> to vector<128x32xf32>
    %15 = arith.addf %11, %14 : vector<128x32xf32>
    %16 = math.tanh %15 : vector<128x32xf32>
    %c1_16 = arith.constant 1 : index
    %c0_17 = arith.constant 0 : index
    %c0_18 = arith.constant 0 : index
    %17 = vector.load %arg6[%c1_16, %c0_17, %c0_18] : memref<2x128x128xf32, #tpu.memory_space<vmem>>, vector<1x128x128xf32>
    %18 = vector.shape_cast %17 : vector<1x128x128xf32> to vector<128x128xf32>
    %cst_19 = arith.constant dense<0.000000e+00> : vector<128x32xf32>
    %19 = tpu.matmul %18, %8, %cst_19 {dimension_numbers = #tpu.dot_dimension_numbers<[1], [0], [0], [1], [0, 0, 1, 1], [], []>} : vector<128x128xf32>, vector<128x32xf32>, vector<128x32xf32> -> vector<128x32xf32>
    %c1_20 = arith.constant 1 : index
    %c0_21 = arith.constant 0 : index
    %c0_22 = arith.constant 0 : index
    %20 = vector.load %arg7[%c1_20, %c0_21, %c0_22] : memref<2x128x1xf32, #tpu.memory_space<vmem>>, vector<1x128x1xf32>
    %21 = vector.shape_cast %20 : vector<1x128x1xf32> to vector<128x1xf32>
    %22 = vector.broadcast %21 : vector<128x1xf32> to vector<128x32xf32>
    %23 = arith.addf %19, %22 : vector<128x32xf32>
    %24 = arith.negf %23 : vector<128x32xf32>
    %25 = math.exp %24 : vector<128x32xf32>
    %cst_23 = arith.constant 1.000000e+00 : f32
    %26 = vector.broadcast %cst_23 : f32 to vector<128x32xf32>
    %27 = arith.addf %26, %25 : vector<128x32xf32>
    %28 = arith.divf %26, %27 : vector<128x32xf32>
    %29 = arith.mulf %16, %28 : vector<128x32xf32>
    %c1_24 = arith.constant 1 : index
    %c0_25 = arith.constant 0 : index
    %c0_26 = arith.constant 0 : index
    %30 = vector.load %arg8[%c1_24, %c0_25, %c0_26] : memref<2x8x128xf32, #tpu.memory_space<vmem>>, vector<1x8x128xf32>
    %31 = vector.shape_cast %30 : vector<1x8x128xf32> to vector<8x128xf32>
    %cst_27 = arith.constant dense<0.000000e+00> : vector<8x32xf32>
    %32 = tpu.matmul %31, %29, %cst_27 {dimension_numbers = #tpu.dot_dimension_numbers<[1], [0], [0], [1], [0, 0, 1, 1], [], []>} : vector<8x128xf32>, vector<128x32xf32>, vector<8x32xf32> -> vector<8x32xf32>
    %c1_28 = arith.constant 1 : index
    %c0_29 = arith.constant 0 : index
    %c0_30 = arith.constant 0 : index
    %33 = vector.load %arg9[%c1_28, %c0_29, %c0_30] : memref<2x8x1xf32, #tpu.memory_space<vmem>>, vector<1x8x1xf32>
    %34 = vector.shape_cast %33 : vector<1x8x1xf32> to vector<8x1xf32>
    %35 = vector.broadcast %34 : vector<8x1xf32> to vector<8x32xf32>
    %36 = arith.addf %32, %35 : vector<8x32xf32>
    %37 = vector.extract_strided_slice %36 {offsets = [0, 0], sizes = [4, 32], strides = [1, 1]} : vector<8x32xf32> to vector<4x32xf32>
    %38 = vector.extract_strided_slice %36 {offsets = [4, 0], sizes = [4, 32], strides = [1, 1]} : vector<8x32xf32> to vector<4x32xf32>
    %39 = arith.subf %6, %38 : vector<4x32xf32>
    %cst_31 = arith.constant 0.000000e+00 : f32
    %40 = vector.broadcast %cst_31 : f32 to vector<4x32xf32>
    %41 = arith.subf %40, %37 : vector<4x32xf32>
    %42 = math.exp %41 : vector<4x32xf32>
    %43 = arith.mulf %39, %42 : vector<4x32xf32>
    %44 = tpu.concatenate %5, %43 in 0 : vector<4x32xf32>, vector<4x32xf32> -> vector<8x32xf32>
    %c1_32 = arith.constant 1 : index
    %c0_33 = arith.constant 0 : index
    %c0_34 = arith.constant 0 : index
    %45 = vector.load %arg3[%c1_32, %c0_33, %c0_34] : memref<2x8x8xf32, #tpu.memory_space<vmem>>, vector<1x8x8xf32>
    %46 = vector.shape_cast %45 : vector<1x8x8xf32> to vector<8x8xf32>
    %cst_35 = arith.constant dense<0.000000e+00> : vector<8x32xf32>
    %47 = tpu.matmul %46, %44, %cst_35 {dimension_numbers = #tpu.dot_dimension_numbers<[1], [0], [0], [1], [0, 0, 1, 1], [], []>} : vector<8x8xf32>, vector<8x32xf32>, vector<8x32xf32> -> vector<8x32xf32>
    %48 = vector.extract_strided_slice %47 {offsets = [0, 0], sizes = [4, 32], strides = [1, 1]} : vector<8x32xf32> to vector<4x32xf32>
    %49 = vector.extract_strided_slice %47 {offsets = [4, 0], sizes = [4, 32], strides = [1, 1]} : vector<8x32xf32> to vector<4x32xf32>
    %c0_36 = arith.constant 0 : index
    %c0_37 = arith.constant 0 : index
    %50 = vector.load %arg11[%c0_36, %c0_37] : memref<128x32xf32, #tpu.memory_space<vmem>>, vector<4x32xf32>
    tpu.vector_store %arg11[%c0_36, %c0_37], %48 {strides = array<i32>} : memref<128x32xf32, #tpu.memory_space<vmem>>, vector<4x32xf32>,
    %c0_38 = arith.constant 0 : index
    %c0_39 = arith.constant 0 : index
    %51 = vector.load %arg11[%c0_38, %c0_39] : memref<128x32xf32, #tpu.memory_space<vmem>>, vector<128x32xf32>
    %c0_40 = arith.constant 0 : index
    %c0_41 = arith.constant 0 : index
    %c0_42 = arith.constant 0 : index
    %52 = vector.load %arg4[%c0_40, %c0_41, %c0_42] : memref<2x128x128xf32, #tpu.memory_space<vmem>>, vector<1x128x128xf32>
    %53 = vector.shape_cast %52 : vector<1x128x128xf32> to vector<128x128xf32>
    %cst_43 = arith.constant dense<0.000000e+00> : vector<128x32xf32>
    %54 = tpu.matmul %53, %51, %cst_43 {dimension_numbers = #tpu.dot_dimension_numbers<[1], [0], [0], [1], [0, 0, 1, 1], [], []>} : vector<128x128xf32>, vector<128x32xf32>, vector<128x32xf32> -> vector<128x32xf32>
    %c0_44 = arith.constant 0 : index
    %c0_45 = arith.constant 0 : index
    %c0_46 = arith.constant 0 : index
    %55 = vector.load %arg5[%c0_44, %c0_45, %c0_46] : memref<2x128x1xf32, #tpu.memory_space<vmem>>, vector<1x128x1xf32>
    %56 = vector.shape_cast %55 : vector<1x128x1xf32> to vector<128x1xf32>
    %57 = vector.broadcast %56 : vector<128x1xf32> to vector<128x32xf32>
    %58 = arith.addf %54, %57 : vector<128x32xf32>
    %59 = math.tanh %58 : vector<128x32xf32>
    %c0_47 = arith.constant 0 : index
    %c0_48 = arith.constant 0 : index
    %c0_49 = arith.constant 0 : index
    %60 = vector.load %arg6[%c0_47, %c0_48, %c0_49] : memref<2x128x128xf32, #tpu.memory_space<vmem>>, vector<1x128x128xf32>
    %61 = vector.shape_cast %60 : vector<1x128x128xf32> to vector<128x128xf32>
    %cst_50 = arith.constant dense<0.000000e+00> : vector<128x32xf32>
    %62 = tpu.matmul %61, %51, %cst_50 {dimension_numbers = #tpu.dot_dimension_numbers<[1], [0], [0], [1], [0, 0, 1, 1], [], []>} : vector<128x128xf32>, vector<128x32xf32>, vector<128x32xf32> -> vector<128x32xf32>
    %c0_51 = arith.constant 0 : index
    %c0_52 = arith.constant 0 : index
    %c0_53 = arith.constant 0 : index
    %63 = vector.load %arg7[%c0_51, %c0_52, %c0_53] : memref<2x128x1xf32, #tpu.memory_space<vmem>>, vector<1x128x1xf32>
    %64 = vector.shape_cast %63 : vector<1x128x1xf32> to vector<128x1xf32>
    %65 = vector.broadcast %64 : vector<128x1xf32> to vector<128x32xf32>
    %66 = arith.addf %62, %65 : vector<128x32xf32>
    %67 = arith.negf %66 : vector<128x32xf32>
    %68 = math.exp %67 : vector<128x32xf32>
    %cst_54 = arith.constant 1.000000e+00 : f32
    %69 = vector.broadcast %cst_54 : f32 to vector<128x32xf32>
    %70 = arith.addf %69, %68 : vector<128x32xf32>
    %71 = arith.divf %69, %70 : vector<128x32xf32>
    %72 = arith.mulf %59, %71 : vector<128x32xf32>
    %c0_55 = arith.constant 0 : index
    %c0_56 = arith.constant 0 : index
    %c0_57 = arith.constant 0 : index
    %73 = vector.load %arg8[%c0_55, %c0_56, %c0_57] : memref<2x8x128xf32, #tpu.memory_space<vmem>>, vector<1x8x128xf32>
    %74 = vector.shape_cast %73 : vector<1x8x128xf32> to vector<8x128xf32>
    %cst_58 = arith.constant dense<0.000000e+00> : vector<8x32xf32>
    %75 = tpu.matmul %74, %72, %cst_58 {dimension_numbers = #tpu.dot_dimension_numbers<[1], [0], [0], [1], [0, 0, 1, 1], [], []>} : vector<8x128xf32>, vector<128x32xf32>, vector<8x32xf32> -> vector<8x32xf32>
    %c0_59 = arith.constant 0 : index
    %c0_60 = arith.constant 0 : index
    %c0_61 = arith.constant 0 : index
    %76 = vector.load %arg9[%c0_59, %c0_60, %c0_61] : memref<2x8x1xf32, #tpu.memory_space<vmem>>, vector<1x8x1xf32>
    %77 = vector.shape_cast %76 : vector<1x8x1xf32> to vector<8x1xf32>
    %78 = vector.broadcast %77 : vector<8x1xf32> to vector<8x32xf32>
    %79 = arith.addf %75, %78 : vector<8x32xf32>
    %80 = vector.extract_strided_slice %79 {offsets = [0, 0], sizes = [4, 32], strides = [1, 1]} : vector<8x32xf32> to vector<4x32xf32>
    %81 = vector.extract_strided_slice %79 {offsets = [4, 0], sizes = [4, 32], strides = [1, 1]} : vector<8x32xf32> to vector<4x32xf32>
    %82 = arith.subf %49, %81 : vector<4x32xf32>
    %cst_62 = arith.constant 0.000000e+00 : f32
    %83 = vector.broadcast %cst_62 : f32 to vector<4x32xf32>
    %84 = arith.subf %83, %80 : vector<4x32xf32>
    %85 = math.exp %84 : vector<4x32xf32>
    %86 = arith.mulf %82, %85 : vector<4x32xf32>
    %87 = tpu.concatenate %48, %86 in 0 : vector<4x32xf32>, vector<4x32xf32> -> vector<8x32xf32>
    %c0_63 = arith.constant 0 : index
    %c0_64 = arith.constant 0 : index
    %c0_65 = arith.constant 0 : index
    %88 = vector.load %arg3[%c0_63, %c0_64, %c0_65] : memref<2x8x8xf32, #tpu.memory_space<vmem>>, vector<1x8x8xf32>
    %89 = vector.shape_cast %88 : vector<1x8x8xf32> to vector<8x8xf32>
    %cst_66 = arith.constant dense<0.000000e+00> : vector<8x32xf32>
    %90 = tpu.matmul %89, %87, %cst_66 {dimension_numbers = #tpu.dot_dimension_numbers<[1], [0], [0], [1], [0, 0, 1, 1], [], []>} : vector<8x8xf32>, vector<8x32xf32>, vector<8x32xf32> -> vector<8x32xf32>
    %c0_67 = arith.constant 0 : index
    %c0_68 = arith.constant 0 : index
    %c0_69 = arith.constant 0 : index
    %91 = vector.load %arg10[%c0_67, %c0_68, %c0_69] : memref<1x8x32xf32, #tpu.memory_space<vmem>>, vector<1x8x32xf32>
    %92 = vector.shape_cast %91 : vector<1x8x32xf32> to vector<8x32xf32>
    %93 = vector.shape_cast %90 : vector<8x32xf32> to vector<1x8x32xf32>
    tpu.vector_store %arg10[%c0_67, %c0_68, %c0_69], %93 {strides = array<i32>} : memref<1x8x32xf32, #tpu.memory_space<vmem>>, vector<1x8x32xf32>,
    return
  }
  func.func @transform_0(%arg0: i32) -> (i32, i32, i32) {
    %c0_i32 = arith.constant 0 : i32
    %c0_i32_0 = arith.constant 0 : i32
    %c0_i32_1 = arith.constant 0 : i32
    return %arg0, %c0_i32, %c0_i32_0 : i32, i32, i32
  }
  func.func @transform_1(%arg0: i32) -> (i32, i32, i32) {
    %c0_i32 = arith.constant 0 : i32
    %c0_i32_0 = arith.constant 0 : i32
    %c0_i32_1 = arith.constant 0 : i32
    return %arg0, %c0_i32, %c0_i32_0 : i32, i32, i32
  }
  func.func @transform_2(%arg0: i32) -> (i32, i32, i32) {
    %c0_i32 = arith.constant 0 : i32
    %c0_i32_0 = arith.constant 0 : i32
    %c0_i32_1 = arith.constant 0 : i32
    %c0_i32_2 = arith.constant 0 : i32
    return %c0_i32, %c0_i32_0, %c0_i32_1 : i32, i32, i32
  }
  func.func @transform_3(%arg0: i32) -> (i32, i32, i32) {
    %c0_i32 = arith.constant 0 : i32
    %c0_i32_0 = arith.constant 0 : i32
    %c0_i32_1 = arith.constant 0 : i32
    %c0_i32_2 = arith.constant 0 : i32
    return %c0_i32, %c0_i32_0, %c0_i32_1 : i32, i32, i32
  }
  func.func @transform_4(%arg0: i32) -> (i32, i32, i32) {
    %c0_i32 = arith.constant 0 : i32
    %c0_i32_0 = arith.constant 0 : i32
    %c0_i32_1 = arith.constant 0 : i32
    %c0_i32_2 = arith.constant 0 : i32
    return %c0_i32, %c0_i32_0, %c0_i32_1 : i32, i32, i32
  }
  func.func @transform_5(%arg0: i32) -> (i32, i32, i32) {
    %c0_i32 = arith.constant 0 : i32
    %c0_i32_0 = arith.constant 0 : i32
    %c0_i32_1 = arith.constant 0 : i32
    %c0_i32_2 = arith.constant 0 : i32
    return %c0_i32, %c0_i32_0, %c0_i32_1 : i32, i32, i32
  }
  func.func @transform_6(%arg0: i32) -> (i32, i32, i32) {
    %c0_i32 = arith.constant 0 : i32
    %c0_i32_0 = arith.constant 0 : i32
    %c0_i32_1 = arith.constant 0 : i32
    %c0_i32_2 = arith.constant 0 : i32
    return %c0_i32, %c0_i32_0, %c0_i32_1 : i32, i32, i32
  }
  func.func @transform_7(%arg0: i32) -> (i32, i32, i32) {
    %c0_i32 = arith.constant 0 : i32
    %c0_i32_0 = arith.constant 0 : i32
    %c0_i32_1 = arith.constant 0 : i32
    %c0_i32_2 = arith.constant 0 : i32
    return %c0_i32, %c0_i32_0, %c0_i32_1 : i32, i32, i32
  }
  func.func @transform_8(%arg0: i32) -> (i32, i32, i32) {
    %c0_i32 = arith.constant 0 : i32
    %c0_i32_0 = arith.constant 0 : i32
    %c0_i32_1 = arith.constant 0 : i32
    %c0_i32_2 = arith.constant 0 : i32
    return %c0_i32, %c0_i32_0, %c0_i32_1 : i32, i32, i32
  }
  func.func @transform_9(%arg0: i32) -> (i32, i32, i32) {
    %c0_i32 = arith.constant 0 : i32
    %c0_i32_0 = arith.constant 0 : i32
    %c0_i32_1 = arith.constant 0 : i32
    return %arg0, %c0_i32, %c0_i32_0 : i32, i32, i32
  }
}

</mosaic_0001>

<llo_original>
// kernel: tpu_custom_call.1
$region0: #{tpu_custom_call.1}
  #allocation0 [shape = 'u32[]', space=smem, size = 0x4, offset = 0x4, fixed_abs, tag = 'smem constant byte address 0x4 - core index']
  #allocation1 [shape = 'u32[144,128]{1,0:T(1,128)}', space=vmem, size = 0x12000, scoped, tag = 'internal scratch']
  #allocation2 [shape = 'f32[128,32]{1,0:T(8,128)}', space=vmem, size = 0x10000, scoped, tag = 'scratch operand']
  %s0 = inlined_call_operand.vmem [shape: f32[2,8,32], index: 0, kind: input, shape index: {}]
  %s1 = inlined_call_operand.vmem [shape: f32[2,128,32], index: 1, kind: input, shape index: {}]
  %s2 = inlined_call_operand.vmem [shape: f32[2,8,8], index: 2, kind: input, shape index: {}]
  %s3 = inlined_call_operand.vmem [shape: f32[2,128,128], index: 3, kind: input, shape index: {}]
  %s4 = inlined_call_operand.vmem [shape: f32[2,128,1], index: 4, kind: input, shape index: {}]
  %s5 = inlined_call_operand.vmem [shape: f32[2,128,128], index: 5, kind: input, shape index: {}]
  %s6 = inlined_call_operand.vmem [shape: f32[2,128,1], index: 6, kind: input, shape index: {}]
  %s7 = inlined_call_operand.vmem [shape: f32[2,8,128], index: 7, kind: input, shape index: {}]
  %s8 = inlined_call_operand.vmem [shape: f32[2,8,1], index: 8, kind: input, shape index: {}]
  %s9 = inlined_call_operand.hbm [shape: f32[2,8,32], index: 9, kind: output, shape index: {}]
  %s10 = sld [smem:[#allocation0]]
  $region69: #{tpu_custom_call.1} parent=0
    _
  %s12 = ssub.s32 1, %s10
  %s13 = scalar_select 0, %s12, %s10
  $region1: #{tpu_custom_call.1} parent=0
    #allocation3 [shape = 'u8[8192]{0}', space=vmem, size = 0x2000, scoped, tag = 'output window, operand 0']
    #allocation4 [shape = 's32[2]{0}', space=sflag, size = 0x8, scoped, tag = 'scoped memory for tpu_custom_call.1']
    %14 = vsyncpa [#allocation4], 0
    %s15 = scalar_lea.sflag [#allocation4], 1
    %16 = vsyncpa %s15, 0
    loop: start=0, step=1, limit=4
    $region2: #{tpu_custom_call.1} parent=1 // loop_pre_header
      _
    $region3: #{tpu_custom_call.1} parent=1 // loop_header
      %s18 = sphi 0, %s22
      %p19 = scmp.ge.s32.totalorder %s18, 4
      %s28 = sphi 0, %s30
      %s31 = sphi 0, %s28
      %s32 = sphi 0, %s31
      %s48 = sphi 0, %s32
      %s54 = sphi 0, %s56
      %s57 = sphi 0, %s54
      %s58 = sphi 0, %s57
      %s74 = sphi 0, %s58
      %s78 = sphi 0, %s78
      %s80 = sphi 0, %s78
      %s81 = sphi 0, %s80
      %s95 = sphi 0, %s81
      %s99 = sphi 0, %s99
      %s101 = sphi 0, %s99
      %s102 = sphi 0, %s101
      %s116 = sphi 0, %s102
      %s120 = sphi 0, %s120
      %s122 = sphi 0, %s120
      %s123 = sphi 0, %s122
      %s137 = sphi 0, %s123
      %s141 = sphi 0, %s141
      %s143 = sphi 0, %s141
      %s144 = sphi 0, %s143
      %s158 = sphi 0, %s144
      %s162 = sphi 0, %s162
      %s164 = sphi 0, %s162
      %s165 = sphi 0, %s164
      %s179 = sphi 0, %s165
      %s183 = sphi 0, %s183
      %s185 = sphi 0, %s183
      %s186 = sphi 0, %s185
      %s200 = sphi 0, %s186
      %s204 = sphi 0, %s204
      %s206 = sphi 0, %s204
      %s207 = sphi 0, %s206
      %s221 = sphi 0, %s207
      %s227 = sphi 0, %s229
      %s230 = sphi 0, %s227
      %s231 = sphi 0, %s230
      %s247 = sphi 0, %s231
    $region4: #{tpu_custom_call.1} parent=1 // loop_header_branch
      %21 = sbr.rel (%p19) target = $region8
    $region5: #{tpu_custom_call.1} parent=1 // loop_body
      %s23 = ssub.s32 %s18, 1
      %s24 = ssub.s32 %s18, 2
      %s25 = sadd.s32 %s18, 1
      %s26 = ssub.s32 %s18, %s25
      %p27 = scmp.eq.s32.totalorder %s26, 0
      %s29 = sadd.s32 %s28, 1
      %s30 = scalar_select %p27, %s28, %s29
      %p33 = pneg %p27
      %p34 = scmp.eq.s32.totalorder %s18, 1
      %p35 = por %p33, %p34
      %p36 = scmp.ne.s32.totalorder %s28, %s31
      %p37 = scmp.eq.s32.totalorder %s18, 0
      %p38 = por %p36, %p37
      %p39 = scmp.ne.s32.totalorder %s28, %s31
      %p40 = scmp.eq.s32.totalorder %s23, 1
      %p41 = por %p39, %p40
      %p42 = scmp.ne.s32.totalorder %s31, %s32
      %p43 = scmp.eq.s32.totalorder %s23, 0
      %p44 = por %p42, %p43
      %p45 = scmp.ne.s32.totalorder %s31, %s32
      %p46 = scmp.eq.s32.totalorder %s24, 1
      %p47 = por %p45, %p46
      %p49 = scmp.ne.s32.totalorder %s32, %s48
      %p50 = scmp.eq.s32.totalorder %s24, 0
      %p51 = por %p49, %p50
      %s52 = ssub.s32 %s18, %s25
      %p53 = scmp.eq.s32.totalorder %s52, 0
      %s55 = sadd.s32 %s54, 1
      %s56 = scalar_select %p53, %s54, %s55
      %p59 = pneg %p53
      %p60 = scmp.eq.s32.totalorder %s18, 1
      %p61 = por %p59, %p60
      %p62 = scmp.ne.s32.totalorder %s54, %s57
      %p63 = scmp.eq.s32.totalorder %s18, 0
      %p64 = por %p62, %p63
      %p65 = scmp.ne.s32.totalorder %s54, %s57
      %p66 = scmp.eq.s32.totalorder %s23, 1
      %p67 = por %p65, %p66
      %p68 = scmp.ne.s32.totalorder %s57, %s58
      %p69 = scmp.eq.s32.totalorder %s23, 0
      %p70 = por %p68, %p69
      %p71 = scmp.ne.s32.totalorder %s57, %s58
      %p72 = scmp.eq.s32.totalorder %s24, 1
      %p73 = por %p71, %p72
      %p75 = scmp.ne.s32.totalorder %s58, %s74
      %p76 = scmp.eq.s32.totalorder %s24, 0
      %p77 = por %p75, %p76
      %s79 = sadd.s32 %s78, 1
      %p82 = scmp.eq.s32.totalorder %s18, 1
      %p83 = scmp.ne.s32.totalorder %s78, %s80
      %p84 = scmp.eq.s32.totalorder %s18, 0
      %p85 = por %p83, %p84
      %p86 = scmp.ne.s32.totalorder %s78, %s80
      %p87 = scmp.eq.s32.totalorder %s23, 1
      %p88 = por %p86, %p87
      %p89 = scmp.ne.s32.totalorder %s80, %s81
      %p90 = scmp.eq.s32.totalorder %s23, 0
      %p91 = por %p89, %p90
      %p92 = scmp.ne.s32.totalorder %s80, %s81
      %p93 = scmp.eq.s32.totalorder %s24, 1
      %p94 = por %p92, %p93
      %p96 = scmp.ne.s32.totalorder %s81, %s95
      %p97 = scmp.eq.s32.totalorder %s24, 0
      %p98 = por %p96, %p97
      %s100 = sadd.s32 %s99, 1
      %p103 = scmp.eq.s32.totalorder %s18, 1
      %p104 = scmp.ne.s32.totalorder %s99, %s101
      %p105 = scmp.eq.s32.totalorder %s18, 0
      %p106 = por %p104, %p105
      %p107 = scmp.ne.s32.totalorder %s99, %s101
      %p108 = scmp.eq.s32.totalorder %s23, 1
      %p109 = por %p107, %p108
      %p110 = scmp.ne.s32.totalorder %s101, %s102
      %p111 = scmp.eq.s32.totalorder %s23, 0
      %p112 = por %p110, %p111
      %p113 = scmp.ne.s32.totalorder %s101, %s102
      %p114 = scmp.eq.s32.totalorder %s24, 1
      %p115 = por %p113, %p114
      %p117 = scmp.ne.s32.totalorder %s102, %s116
      %p118 = scmp.eq.s32.totalorder %s24, 0
      %p119 = por %p117, %p118
      %s121 = sadd.s32 %s120, 1
      %p124 = scmp.eq.s32.totalorder %s18, 1
      %p125 = scmp.ne.s32.totalorder %s120, %s122
      %p126 = scmp.eq.s32.totalorder %s18, 0
      %p127 = por %p125, %p126
      %p128 = scmp.ne.s32.totalorder %s120, %s122
      %p129 = scmp.eq.s32.totalorder %s23, 1
      %p130 = por %p128, %p129
      %p131 = scmp.ne.s32.totalorder %s122, %s123
      %p132 = scmp.eq.s32.totalorder %s23, 0
      %p133 = por %p131, %p132
      %p134 = scmp.ne.s32.totalorder %s122, %s123
      %p135 = scmp.eq.s32.totalorder %s24, 1
      %p136 = por %p134, %p135
      %p138 = scmp.ne.s32.totalorder %s123, %s137
      %p139 = scmp.eq.s32.totalorder %s24, 0
      %p140 = por %p138, %p139
      %s142 = sadd.s32 %s141, 1
      %p145 = scmp.eq.s32.totalorder %s18, 1
      %p146 = scmp.ne.s32.totalorder %s141, %s143
      %p147 = scmp.eq.s32.totalorder %s18, 0
      %p148 = por %p146, %p147
      %p149 = scmp.ne.s32.totalorder %s141, %s143
      %p150 = scmp.eq.s32.totalorder %s23, 1
      %p151 = por %p149, %p150
      %p152 = scmp.ne.s32.totalorder %s143, %s144
      %p153 = scmp.eq.s32.totalorder %s23, 0
      %p154 = por %p152, %p153
      %p155 = scmp.ne.s32.totalorder %s143, %s144
      %p156 = scmp.eq.s32.totalorder %s24, 1
      %p157 = por %p155, %p156
      %p159 = scmp.ne.s32.totalorder %s144, %s158
      %p160 = scmp.eq.s32.totalorder %s24, 0
      %p161 = por %p159, %p160
      %s163 = sadd.s32 %s162, 1
      %p166 = scmp.eq.s32.totalorder %s18, 1
      %p167 = scmp.ne.s32.totalorder %s162, %s164
      %p168 = scmp.eq.s32.totalorder %s18, 0
      %p169 = por %p167, %p168
      %p170 = scmp.ne.s32.totalorder %s162, %s164
      %p171 = scmp.eq.s32.totalorder %s23, 1
      %p172 = por %p170, %p171
      %p173 = scmp.ne.s32.totalorder %s164, %s165
      %p174 = scmp.eq.s32.totalorder %s23, 0
      %p175 = por %p173, %p174
      %p176 = scmp.ne.s32.totalorder %s164, %s165
      %p177 = scmp.eq.s32.totalorder %s24, 1
      %p178 = por %p176, %p177
      %p180 = scmp.ne.s32.totalorder %s165, %s179
      %p181 = scmp.eq.s32.totalorder %s24, 0
      %p182 = por %p180, %p181
      %s184 = sadd.s32 %s183, 1
      %p187 = scmp.eq.s32.totalorder %s18, 1
      %p188 = scmp.ne.s32.totalorder %s183, %s185
      %p189 = scmp.eq.s32.totalorder %s18, 0
      %p190 = por %p188, %p189
      %p191 = scmp.ne.s32.totalorder %s183, %s185
      %p192 = scmp.eq.s32.totalorder %s23, 1
      %p193 = por %p191, %p192
      %p194 = scmp.ne.s32.totalorder %s185, %s186
      %p195 = scmp.eq.s32.totalorder %s23, 0
      %p196 = por %p194, %p195
      %p197 = scmp.ne.s32.totalorder %s185, %s186
      %p198 = scmp.eq.s32.totalorder %s24, 1
      %p199 = por %p197, %p198
      %p201 = scmp.ne.s32.totalorder %s186, %s200
      %p202 = scmp.eq.s32.totalorder %s24, 0
      %p203 = por %p201, %p202
      %s205 = sadd.s32 %s204, 1
      %p208 = scmp.eq.s32.totalorder %s18, 1
      %p209 = scmp.ne.s32.totalorder %s204, %s206
      %p210 = scmp.eq.s32.totalorder %s18, 0
      %p211 = por %p209, %p210
      %p212 = scmp.ne.s32.totalorder %s204, %s206
      %p213 = scmp.eq.s32.totalorder %s23, 1
      %p214 = por %p212, %p213
      %p215 = scmp.ne.s32.totalorder %s206, %s207
      %p216 = scmp.eq.s32.totalorder %s23, 0
      %p217 = por %p215, %p216
      %p218 = scmp.ne.s32.totalorder %s206, %s207
      %p219 = scmp.eq.s32.totalorder %s24, 1
      %p220 = por %p218, %p219
      %p222 = scmp.ne.s32.totalorder %s207, %s221
      %p223 = scmp.eq.s32.totalorder %s24, 0
      %p224 = por %p222, %p223
      %s225 = ssub.s32 %s18, %s25
      %p226 = scmp.eq.s32.totalorder %s225, 0
      %s228 = sadd.s32 %s227, 1
      %s229 = scalar_select %p226, %s227, %s228
      %p232 = pneg %p226
      %p233 = scmp.eq.s32.totalorder %s18, 1
      %p234 = por %p232, %p233
      %p235 = scmp.ne.s32.totalorder %s227, %s230
      %p236 = scmp.eq.s32.totalorder %s18, 0
      %p237 = por %p235, %p236
      %p238 = scmp.ne.s32.totalorder %s227, %s230
      %p239 = scmp.eq.s32.totalorder %s23, 1
      %p240 = por %p238, %p239
      %p241 = scmp.ne.s32.totalorder %s230, %s231
      %p242 = scmp.eq.s32.totalorder %s23, 0
      %p243 = por %p241, %p242
      %p244 = scmp.ne.s32.totalorder %s230, %s231
      %p245 = scmp.eq.s32.totalorder %s24, 1
      %p246 = por %p244, %p245
      %p248 = scmp.ne.s32.totalorder %s231, %s247
      %p249 = scmp.eq.s32.totalorder %s24, 0
      %p250 = por %p248, %p249
      %p251 = scmp.le.s32.totalorder 1, %s18
      %p252 = scmp.lt.s32.totalorder %s18, 3
      %p253 = pnand %p251, %p252
      %p254 = pneg %p253
      // Predicated region
      $region9: #{tpu_custom_call.1} parent=5 // pred_check
        _
      $region10: #{tpu_custom_call.1} parent=5 // pred_check_branch
        %256 = sbr.rel (%p253) target = $region12
      $region11: #{tpu_custom_call.1} parent=5 // pred_region
        %s257 = ssub.s32 %s18, 1
        // Predicated region
        $region13: #{tpu_custom_call.1} parent=11 // pred_check
          %p258 = pneg %p91
        $region14: #{tpu_custom_call.1} parent=11 // pred_check_branch
          %260 = sbr.rel (%p258) target = $region16
        $region15: #{tpu_custom_call.1} parent=11 // pred_region
          _
        $region16: #{tpu_custom_call.1} parent=11 // pred_fallthru
          _
        // Predicated region
        $region17: #{tpu_custom_call.1} parent=11 // pred_check
          %p261 = pneg %p112
        $region18: #{tpu_custom_call.1} parent=11 // pred_check_branch
          %263 = sbr.rel (%p261) target = $region20
        $region19: #{tpu_custom_call.1} parent=11 // pred_region
          _
        $region20: #{tpu_custom_call.1} parent=11 // pred_fallthru
          _
        // Predicated region
        $region21: #{tpu_custom_call.1} parent=11 // pred_check
          %p264 = pneg %p133
        $region22: #{tpu_custom_call.1} parent=11 // pred_check_branch
          %266 = sbr.rel (%p264) target = $region24
        $region23: #{tpu_custom_call.1} parent=11 // pred_region
          _
        $region24: #{tpu_custom_call.1} parent=11 // pred_fallthru
          _
        // Predicated region
        $region25: #{tpu_custom_call.1} parent=11 // pred_check
          %p267 = pneg %p154
        $region26: #{tpu_custom_call.1} parent=11 // pred_check_branch
          %269 = sbr.rel (%p267) target = $region28
        $region27: #{tpu_custom_call.1} parent=11 // pred_region
          _
        $region28: #{tpu_custom_call.1} parent=11 // pred_fallthru
          _
        // Predicated region
        $region29: #{tpu_custom_call.1} parent=11 // pred_check
          %p270 = pneg %p175
        $region30: #{tpu_custom_call.1} parent=11 // pred_check_branch
          %272 = sbr.rel (%p270) target = $region32
        $region31: #{tpu_custom_call.1} parent=11 // pred_region
          _
        $region32: #{tpu_custom_call.1} parent=11 // pred_fallthru
          _
        // Predicated region
        $region33: #{tpu_custom_call.1} parent=11 // pred_check
          %p273 = pneg %p196
        $region34: #{tpu_custom_call.1} parent=11 // pred_check_branch
          %275 = sbr.rel (%p273) target = $region36
        $region35: #{tpu_custom_call.1} parent=11 // pred_region
          _
        $region36: #{tpu_custom_call.1} parent=11 // pred_fallthru
          _
        // Predicated region
        $region37: #{tpu_custom_call.1} parent=11 // pred_check
          %p276 = pneg %p217
        $region38: #{tpu_custom_call.1} parent=11 // pred_check_branch
          %278 = sbr.rel (%p276) target = $region40
        $region39: #{tpu_custom_call.1} parent=11 // pred_region
          _
        $region40: #{tpu_custom_call.1} parent=11 // pred_fallthru
          _
      $region12: #{tpu_custom_call.1} parent=5 // pred_fallthru
        _
      %p279 = scmp.lt.s32.totalorder %s18, 2
      // Predicated region
      $region41: #{tpu_custom_call.1} parent=5 // pred_check
        %p280 = pneg %p279
      $region42: #{tpu_custom_call.1} parent=5 // pred_check_branch
        %282 = sbr.rel (%p280) target = $region44
      $region43: #{tpu_custom_call.1} parent=5 // pred_region
        // Predicated region
        $region45: #{tpu_custom_call.1} parent=43 // pred_check
          %p283 = pneg %p38
        $region46: #{tpu_custom_call.1} parent=43 // pred_check_branch
          %285 = sbr.rel (%p283) target = $region48
        $region47: #{tpu_custom_call.1} parent=43 // pred_region
          %p286 = scmp.lt.s32.totalorder %s18, 1
          %s287 = scalar_select %p286, %s18, 1
          %s288 = smul.addr %s287, 8
          %s289 = scalar_lea.vmem %s0, %s288
        $region48: #{tpu_custom_call.1} parent=43 // pred_fallthru
          _
        // Predicated region
        $region49: #{tpu_custom_call.1} parent=43 // pred_check
          %p290 = pneg %p64
        $region50: #{tpu_custom_call.1} parent=43 // pred_check_branch
          %292 = sbr.rel (%p290) target = $region52
        $region51: #{tpu_custom_call.1} parent=43 // pred_region
          %p293 = scmp.lt.s32.totalorder %s18, 1
          %s294 = scalar_select %p293, %s18, 1
          %s295 = smul.addr %s294, 16
          %s296 = smul.addr %s295, 8
          %s297 = scalar_lea.vmem %s1, %s296
        $region52: #{tpu_custom_call.1} parent=43 // pred_fallthru
          _
      $region44: #{tpu_custom_call.1} parent=5 // pred_fallthru
        _
      %p298 = scmp.le.s32.totalorder 1, %s18
      %p299 = scmp.lt.s32.totalorder %s18, 3
      %p300 = pnand %p298, %p299
      %p301 = pneg %p300
      // Predicated region
      $region53: #{tpu_custom_call.1} parent=5 // pred_check
        _
      $region54: #{tpu_custom_call.1} parent=5 // pred_check_branch
        %303 = sbr.rel (%p300) target = $region56
      $region55: #{tpu_custom_call.1} parent=5 // pred_region
        %s304 = ssub.s32 %s18, 1
        %p305 = scmp.lt.s32.totalorder %s23, 1
        %s306 = scalar_select %p305, %s23, 1
        %s307 = smul.addr %s306, 8
        %s308 = scalar_lea.vmem %s0, %s307
        %p309 = pneg %p44
        %p310 = pneg %p41
        %p311 = scmp.lt.s32.totalorder %s23, 1
        %s312 = scalar_select %p311, %s23, 1
        %s313 = smul.addr %s312, 16
        %s314 = smul.addr %s313, 8
        %s315 = scalar_lea.vmem %s1, %s314
        %p316 = pneg %p70
        %p317 = pneg %p67
        %p318 = pneg %p91
        %p319 = pneg %p88
        %p320 = pneg %p112
        %p321 = pneg %p109
        %p322 = pneg %p133
        %p323 = pneg %p130
        %p324 = pneg %p154
        %p325 = pneg %p151
        %p326 = pneg %p175
        %p327 = pneg %p172
        %p328 = pneg %p196
        %p329 = pneg %p193
        %p330 = pneg %p217
        %p331 = pneg %p214
        %p332 = pneg %p243
        %p333 = pneg %p240
        %s334 = sand.u32 %s230, 1
        %s335 = scalar_lea.sflag [#allocation4], %s334
        %s336 = sand.u32 %s230, 1
        %s337 = smul.addr %s336, 8
        %s338 = scalar_lea.vmem [#allocation3], %s337
        %p339 = scmp.lt.s32.totalorder %s23, 1
        %s340 = scalar_select %p339, %s23, 1
        %s341 = smul.addr %s340, 8
        %s342 = scalar_lea.vmem %s0, %s341
        %p343 = scmp.lt.s32.totalorder %s23, 1
        %s344 = scalar_select %p343, %s23, 1
        %s345 = smul.addr %s344, 16
        %s346 = smul.addr %s345, 8
        %s347 = scalar_lea.vmem %s1, %s346
        %v348 = vld [vmem:[%s347] sm:$0xff]
        %v349 = vld [vmem:[%s347 + $0x8] sm:$0xff]
        %v350 = vld [vmem:[%s347 + $0x10] sm:$0xff]
        %v351 = vld [vmem:[%s347 + $0x18] sm:$0xff]
        %v352 = vld [vmem:[%s347 + $0x20] sm:$0xff]
        %v353 = vld [vmem:[%s347 + $0x28] sm:$0xff]
        %v354 = vld [vmem:[%s347 + $0x30] sm:$0xff]
        %v355 = vld [vmem:[%s347 + $0x38] sm:$0xff]
        %v356 = vld [vmem:[%s347 + $0x40] sm:$0xff]
        %v357 = vld [vmem:[%s347 + $0x48] sm:$0xff]
        %v358 = vld [vmem:[%s347 + $0x50] sm:$0xff]
        %v359 = vld [vmem:[%s347 + $0x58] sm:$0xff]
        %v360 = vld [vmem:[%s347 + $0x60] sm:$0xff]
        %v361 = vld [vmem:[%s347 + $0x68] sm:$0xff]
        %v362 = vld [vmem:[%s347 + $0x70] sm:$0xff]
        %v363 = vld [vmem:[%s347 + $0x78] sm:$0xff]
        %vm364 = vcmask 261120
        %365 = vst.msk [vmem:[#allocation2] sm:$0xff] %vm364, %v348
        %366 = vst.msk [vmem:[#allocation2 + $0x8] sm:$0xff] %vm364, %v349
        %367 = vst.msk [vmem:[#allocation2 + $0x10] sm:$0xff] %vm364, %v350
        %368 = vst.msk [vmem:[#allocation2 + $0x18] sm:$0xff] %vm364, %v351
        %369 = vst.msk [vmem:[#allocation2 + $0x20] sm:$0xff] %vm364, %v352
        %370 = vst.msk [vmem:[#allocation2 + $0x28] sm:$0xff] %vm364, %v353
        %371 = vst.msk [vmem:[#allocation2 + $0x30] sm:$0xff] %vm364, %v354
        %372 = vst.msk [vmem:[#allocation2 + $0x38] sm:$0xff] %vm364, %v355
        %373 = vst.msk [vmem:[#allocation2 + $0x40] sm:$0xff] %vm364, %v356
        %374 = vst.msk [vmem:[#allocation2 + $0x48] sm:$0xff] %vm364, %v357
        %375 = vst.msk [vmem:[#allocation2 + $0x50] sm:$0xff] %vm364, %v358
        %376 = vst.msk [vmem:[#allocation2 + $0x58] sm:$0xff] %vm364, %v359
        %377 = vst.msk [vmem:[#allocation2 + $0x60] sm:$0xff] %vm364, %v360
        %378 = vst.msk [vmem:[#allocation2 + $0x68] sm:$0xff] %vm364, %v361
        %379 = vst.msk [vmem:[#allocation2 + $0x70] sm:$0xff] %vm364, %v362
        %380 = vst.msk [vmem:[#allocation2 + $0x78] sm:$0xff] %vm364, %v363
        %v381 = vld [vmem:[%s342] sm:$0xff]
        %vm382 = vcmask 257024
        %383 = vst.msk [vmem:[#allocation2] sm:$0xf] %vm382, %v381
        %v384 = vld [vmem:[#allocation2] sm:$0xff]
        %v385 = vld [vmem:[#allocation2 + $0x8] sm:$0xff]
        %v386 = vld [vmem:[#allocation2 + $0x10] sm:$0xff]
        %v387 = vld [vmem:[#allocation2 + $0x18] sm:$0xff]
        %v388 = vld [vmem:[#allocation2 + $0x20] sm:$0xff]
        %v389 = vld [vmem:[#allocation2 + $0x28] sm:$0xff]
        %v390 = vld [vmem:[#allocation2 + $0x30] sm:$0xff]
        %v391 = vld [vmem:[#allocation2 + $0x38] sm:$0xff]
        %v392 = vld [vmem:[#allocation2 + $0x40] sm:$0xff]
        %v393 = vld [vmem:[#allocation2 + $0x48] sm:$0xff]
        %v394 = vld [vmem:[#allocation2 + $0x50] sm:$0xff]
        %v395 = vld [vmem:[#allocation2 + $0x58] sm:$0xff]
        %v396 = vld [vmem:[#allocation2 + $0x60] sm:$0xff]
        %v397 = vld [vmem:[#allocation2 + $0x68] sm:$0xff]
        %v398 = vld [vmem:[#allocation2 + $0x70] sm:$0xff]
        %v399 = vld [vmem:[#allocation2 + $0x78] sm:$0xff]
        %s400 = scalar_lea.vmem %s3, 128
        %v401 = vld [vmem:[%s400] sm:$0xff]
        %v402 = vld [vmem:[%s400 + $0x8] sm:$0xff]
        %v403 = vld [vmem:[%s400 + $0x10] sm:$0xff]
        %v404 = vld [vmem:[%s400 + $0x18] sm:$0xff]
        %v405 = vld [vmem:[%s400 + $0x20] sm:$0xff]
        %v406 = vld [vmem:[%s400 + $0x28] sm:$0xff]
        %v407 = vld [vmem:[%s400 + $0x30] sm:$0xff]
        %v408 = vld [vmem:[%s400 + $0x38] sm:$0xff]
        %v409 = vld [vmem:[%s400 + $0x40] sm:$0xff]
        %v410 = vld [vmem:[%s400 + $0x48] sm:$0xff]
        %v411 = vld [vmem:[%s400 + $0x50] sm:$0xff]
        %v412 = vld [vmem:[%s400 + $0x58] sm:$0xff]
        %v413 = vld [vmem:[%s400 + $0x60] sm:$0xff]
        %v414 = vld [vmem:[%s400 + $0x68] sm:$0xff]
        %v415 = vld [vmem:[%s400 + $0x70] sm:$0xff]
        %v416 = vld [vmem:[%s400 + $0x78] sm:$0xff]
        %s417 = scalar_lea.vmem %s4, 128
        %v418 = vld [vmem:[%s417] sm:$0xff]
        %v419 = vld [vmem:[%s417 + $0x8] sm:$0xff]
        %v420 = vld [vmem:[%s417 + $0x10] sm:$0xff]
        %v421 = vld [vmem:[%s417 + $0x18] sm:$0xff]
        %v422 = vld [vmem:[%s417 + $0x20] sm:$0xff]
        %v423 = vld [vmem:[%s417 + $0x28] sm:$0xff]
        %v424 = vld [vmem:[%s417 + $0x30] sm:$0xff]
        %v425 = vld [vmem:[%s417 + $0x38] sm:$0xff]
        %v426 = vld [vmem:[%s417 + $0x40] sm:$0xff]
        %v427 = vld [vmem:[%s417 + $0x48] sm:$0xff]
        %v428 = vld [vmem:[%s417 + $0x50] sm:$0xff]
        %v429 = vld [vmem:[%s417 + $0x58] sm:$0xff]
        %v430 = vld [vmem:[%s417 + $0x60] sm:$0xff]
        %v431 = vld [vmem:[%s417 + $0x68] sm:$0xff]
        %v432 = vld [vmem:[%s417 + $0x70] sm:$0xff]
        %v433 = vld [vmem:[%s417 + $0x78] sm:$0xff]
        %435 = vset.pattern.permute.xlu0 0
        %436 = vperm.xlu0 %435, %v418
        %v437 = vpop.permute.xlu0 %436
        %440 = vset.pattern.permute.xlu0 0
        %441 = vperm.xlu0 %440, %v419
        %v442 = vpop.permute.xlu0 %441
        %445 = vset.pattern.permute.xlu0 0
        %446 = vperm.xlu0 %445, %v420
        %v447 = vpop.permute.xlu0 %446
        %450 = vset.pattern.permute.xlu0 0
        %451 = vperm.xlu0 %450, %v421
        %v452 = vpop.permute.xlu0 %451
        %455 = vset.pattern.permute.xlu0 0
        %456 = vperm.xlu0 %455, %v422
        %v457 = vpop.permute.xlu0 %456
        %460 = vset.pattern.permute.xlu0 0
        %461 = vperm.xlu0 %460, %v423
        %v462 = vpop.permute.xlu0 %461
        %465 = vset.pattern.permute.xlu0 0
        %466 = vperm.xlu0 %465, %v424
        %v467 = vpop.permute.xlu0 %466
        %470 = vset.pattern.permute.xlu0 0
        %471 = vperm.xlu0 %470, %v425
        %v472 = vpop.permute.xlu0 %471
        %475 = vset.pattern.permute.xlu0 0
        %476 = vperm.xlu0 %475, %v426
        %v477 = vpop.permute.xlu0 %476
        %480 = vset.pattern.permute.xlu0 0
        %481 = vperm.xlu0 %480, %v427
        %v482 = vpop.permute.xlu0 %481
        %485 = vset.pattern.permute.xlu0 0
        %486 = vperm.xlu0 %485, %v428
        %v487 = vpop.permute.xlu0 %486
        %490 = vset.pattern.permute.xlu0 0
        %491 = vperm.xlu0 %490, %v429
        %v492 = vpop.permute.xlu0 %491
        %495 = vset.pattern.permute.xlu0 0
        %496 = vperm.xlu0 %495, %v430
        %v497 = vpop.permute.xlu0 %496
        %500 = vset.pattern.permute.xlu0 0
        %501 = vperm.xlu0 %500, %v431
        %v502 = vpop.permute.xlu0 %501
        %505 = vset.pattern.permute.xlu0 0
        %506 = vperm.xlu0 %505, %v432
        %v507 = vpop.permute.xlu0 %506
        %510 = vset.pattern.permute.xlu0 0
        %511 = vperm.xlu0 %510, %v433
        %v512 = vpop.permute.xlu0 %511
        %514 = vmatprep.subr.mxu0 0.0
        %515 = vmatpush1.msra.mxu0 %v399
        %516 = vmatprep.subr.mxu0 0.0
        %517 = vmatpush1.msra.mxu0 %v398
        %518 = vmatprep.subr.mxu0 0.0
        %519 = vmatpush1.msra.mxu0 %v397
        %520 = vmatprep.subr.mxu0 0.0
        %521 = vmatpush1.msra.mxu0 %v396
        %522 = vmatprep.subr.mxu0 0.0
        %523 = vmatpush1.msra.mxu0 %v395
        %524 = vmatprep.subr.mxu0 0.0
        %525 = vmatpush1.msra.mxu0 %v394
        %526 = vmatprep.subr.mxu0 0.0
        %527 = vmatpush1.msra.mxu0 %v393
        %528 = vmatprep.subr.mxu0 0.0
        %529 = vmatpush1.msra.mxu0 %v392
        %530 = vmatprep.subr.mxu0 0.0
        %531 = vmatpush1.msra.mxu0 %v391
        %532 = vmatprep.subr.mxu0 0.0
        %533 = vmatpush1.msra.mxu0 %v390
        %534 = vmatprep.subr.mxu0 0.0
        %535 = vmatpush1.msra.mxu0 %v389
        %536 = vmatprep.subr.mxu0 0.0
        %537 = vmatpush1.msra.mxu0 %v388
        %538 = vmatprep.subr.mxu0 0.0
        %539 = vmatpush1.msra.mxu0 %v387
        %540 = vmatprep.subr.mxu0 0.0
        %541 = vmatpush1.msra.mxu0 %v386
        %542 = vmatprep.subr.mxu0 0.0
        %543 = vmatpush1.msra.mxu0 %v385
        %544 = vmatprep.subr.mxu0 0.0
        %545 = vmatpush1.msra.mxu0 %v384
        %546 = vmatprep.subr.mxu0 0.0
        %547 = vmatpush2.msra.mxu0 0.0
        %548 = vmatprep.subr.mxu0 0.0
        %549 = vmatpush2.msra.mxu0 0.0
        %550 = vmatprep.subr.mxu0 0.0
        %551 = vmatpush2.msra.mxu0 0.0
        %552 = vmatprep.subr.mxu0 0.0
        %553 = vmatpush2.msra.mxu0 0.0
        %554 = vmatprep.subr.mxu0 0.0
        %555 = vmatpush2.msra.mxu0 0.0
        %556 = vmatprep.subr.mxu0 0.0
        %557 = vmatpush2.msra.mxu0 0.0
        %558 = vmatprep.subr.mxu0 0.0
        %559 = vmatpush2.msra.mxu0 0.0
        %560 = vmatprep.subr.mxu0 0.0
        %561 = vmatpush2.msra.mxu0 0.0
        %562 = vmatprep.subr.mxu0 0.0
        %563 = vmatpush2.msra.mxu0 0.0
        %564 = vmatprep.subr.mxu0 0.0
        %565 = vmatpush2.msra.mxu0 0.0
        %566 = vmatprep.subr.mxu0 0.0
        %567 = vmatpush2.msra.mxu0 0.0
        %568 = vmatprep.subr.mxu0 0.0
        %569 = vmatpush2.msra.mxu0 0.0
        %570 = vmatprep.subr.mxu0 0.0
        %571 = vmatpush2.msra.mxu0 0.0
        %572 = vmatprep.subr.mxu0 0.0
        %573 = vmatpush2.msra.mxu0 0.0
        %574 = vmatprep.subr.mxu0 0.0
        %575 = vmatpush2.msra.mxu0 0.0
        %576 = vmatprep.subr.mxu0 0.0
        %577 = vmatpush2.msra.mxu0 0.0
        %578 = vmatprep.mubr.f32.mxu0 0.0
        %579 = vmatmul.mubr.f32.gmra.mxu0 %v401
        %v580 = vpop.f32.mrf.mxu0
        %v581 = vadd.f32 %v437, %v580
        %v582 = vpop.f32.mrf.mxu0
        %583 = vmatprep.mubr.f32.mxu0 0.0
        %584 = vmatmul.mubr.f32.gmra.mxu0 %v402
        %v585 = vpop.f32.mrf.mxu0
        %v586 = vadd.f32 %v442, %v585
        %v587 = vpop.f32.mrf.mxu0
        %588 = vmatprep.mubr.f32.mxu0 0.0
        %589 = vmatmul.mubr.f32.gmra.mxu0 %v403
        %v590 = vpop.f32.mrf.mxu0
        %v591 = vadd.f32 %v447, %v590
        %v592 = vpop.f32.mrf.mxu0
        %593 = vmatprep.mubr.f32.mxu0 0.0
        %594 = vmatmul.mubr.f32.gmra.mxu0 %v404
        %v595 = vpop.f32.mrf.mxu0
        %v596 = vadd.f32 %v452, %v595
        %v597 = vpop.f32.mrf.mxu0
        %598 = vmatprep.mubr.f32.mxu0 0.0
        %599 = vmatmul.mubr.f32.gmra.mxu0 %v405
        %v600 = vpop.f32.mrf.mxu0
        %v601 = vadd.f32 %v457, %v600
        %v602 = vpop.f32.mrf.mxu0
        %603 = vmatprep.mubr.f32.mxu0 0.0
        %604 = vmatmul.mubr.f32.gmra.mxu0 %v406
        %v605 = vpop.f32.mrf.mxu0
        %v606 = vadd.f32 %v462, %v605
        %v607 = vpop.f32.mrf.mxu0
        %608 = vmatprep.mubr.f32.mxu0 0.0
        %609 = vmatmul.mubr.f32.gmra.mxu0 %v407
        %v610 = vpop.f32.mrf.mxu0
        %v611 = vadd.f32 %v467, %v610
        %v612 = vpop.f32.mrf.mxu0
        %613 = vmatprep.mubr.f32.mxu0 0.0
        %614 = vmatmul.mubr.f32.gmra.mxu0 %v408
        %v615 = vpop.f32.mrf.mxu0
        %v616 = vadd.f32 %v472, %v615
        %v617 = vpop.f32.mrf.mxu0
        %618 = vmatprep.mubr.f32.mxu0 0.0
        %619 = vmatmul.mubr.f32.gmra.mxu0 %v409
        %v620 = vpop.f32.mrf.mxu0
        %v621 = vadd.f32 %v477, %v620
        %v622 = vpop.f32.mrf.mxu0
        %623 = vmatprep.mubr.f32.mxu0 0.0
        %624 = vmatmul.mubr.f32.gmra.mxu0 %v410
        %v625 = vpop.f32.mrf.mxu0
        %v626 = vadd.f32 %v482, %v625
        %v627 = vpop.f32.mrf.mxu0
        %628 = vmatprep.mubr.f32.mxu0 0.0
        %629 = vmatmul.mubr.f32.gmra.mxu0 %v411
        %v630 = vpop.f32.mrf.mxu0
        %v631 = vadd.f32 %v487, %v630
        %v632 = vpop.f32.mrf.mxu0
        %633 = vmatprep.mubr.f32.mxu0 0.0
        %634 = vmatmul.mubr.f32.gmra.mxu0 %v412
        %v635 = vpop.f32.mrf.mxu0
        %v636 = vadd.f32 %v492, %v635
        %v637 = vpop.f32.mrf.mxu0
        %638 = vmatprep.mubr.f32.mxu0 0.0
        %639 = vmatmul.mubr.f32.gmra.mxu0 %v413
        %v640 = vpop.f32.mrf.mxu0
        %v641 = vadd.f32 %v497, %v640
        %v642 = vpop.f32.mrf.mxu0
        %643 = vmatprep.mubr.f32.mxu0 0.0
        %644 = vmatmul.mubr.f32.gmra.mxu0 %v414
        %v645 = vpop.f32.mrf.mxu0
        %v646 = vadd.f32 %v502, %v645
        %v647 = vpop.f32.mrf.mxu0
        %648 = vmatprep.mubr.f32.mxu0 0.0
        %649 = vmatmul.mubr.f32.gmra.mxu0 %v415
        %v650 = vpop.f32.mrf.mxu0
        %v651 = vadd.f32 %v507, %v650
        %v652 = vpop.f32.mrf.mxu0
        %653 = vmatprep.mubr.f32.mxu0 0.0
        %654 = vmatmul.mubr.f32.gmra.mxu0 %v416
        %v655 = vpop.f32.mrf.mxu0
        %v656 = vadd.f32 %v512, %v655
        %v657 = vpop.f32.mrf.mxu0
        %658 = vdwg.mxu0
        %v659 = vtanh.pop %v581
        %v660 = vtanh.pop %v586
        %v661 = vtanh.pop %v591
        %v662 = vtanh.pop %v596
        %v663 = vtanh.pop %v601
        %v664 = vtanh.pop %v606
        %v665 = vtanh.pop %v611
        %v666 = vtanh.pop %v616
        %v667 = vtanh.pop %v621
        %v668 = vtanh.pop %v626
        %v669 = vtanh.pop %v631
        %v670 = vtanh.pop %v636
        %v671 = vtanh.pop %v641
        %v672 = vtanh.pop %v646
        %v673 = vtanh.pop %v651
        %v674 = vtanh.pop %v656
        %s675 = scalar_lea.vmem %s5, 128
        %v676 = vld [vmem:[%s675] sm:$0xff]
        %v677 = vld [vmem:[%s675 + $0x8] sm:$0xff]
        %v678 = vld [vmem:[%s675 + $0x10] sm:$0xff]
        %v679 = vld [vmem:[%s675 + $0x18] sm:$0xff]
        %v680 = vld [vmem:[%s675 + $0x20] sm:$0xff]
        %v681 = vld [vmem:[%s675 + $0x28] sm:$0xff]
        %v682 = vld [vmem:[%s675 + $0x30] sm:$0xff]
        %v683 = vld [vmem:[%s675 + $0x38] sm:$0xff]
        %v684 = vld [vmem:[%s675 + $0x40] sm:$0xff]
        %v685 = vld [vmem:[%s675 + $0x48] sm:$0xff]
        %v686 = vld [vmem:[%s675 + $0x50] sm:$0xff]
        %v687 = vld [vmem:[%s675 + $0x58] sm:$0xff]
        %v688 = vld [vmem:[%s675 + $0x60] sm:$0xff]
        %v689 = vld [vmem:[%s675 + $0x68] sm:$0xff]
        %v690 = vld [vmem:[%s675 + $0x70] sm:$0xff]
        %v691 = vld [vmem:[%s675 + $0x78] sm:$0xff]
        %s692 = scalar_lea.vmem %s6, 128
        %v693 = vld [vmem:[%s692] sm:$0xff]
        %v694 = vld [vmem:[%s692 + $0x8] sm:$0xff]
        %v695 = vld [vmem:[%s692 + $0x10] sm:$0xff]
        %v696 = vld [vmem:[%s692 + $0x18] sm:$0xff]
        %v697 = vld [vmem:[%s692 + $0x20] sm:$0xff]
        %v698 = vld [vmem:[%s692 + $0x28] sm:$0xff]
        %v699 = vld [vmem:[%s692 + $0x30] sm:$0xff]
        %v700 = vld [vmem:[%s692 + $0x38] sm:$0xff]
        %v701 = vld [vmem:[%s692 + $0x40] sm:$0xff]
        %v702 = vld [vmem:[%s692 + $0x48] sm:$0xff]
        %v703 = vld [vmem:[%s692 + $0x50] sm:$0xff]
        %v704 = vld [vmem:[%s692 + $0x58] sm:$0xff]
        %v705 = vld [vmem:[%s692 + $0x60] sm:$0xff]
        %v706 = vld [vmem:[%s692 + $0x68] sm:$0xff]
        %v707 = vld [vmem:[%s692 + $0x70] sm:$0xff]
        %v708 = vld [vmem:[%s692 + $0x78] sm:$0xff]
        %710 = vset.pattern.permute.xlu0 0
        %711 = vperm.xlu0 %710, %v693
        %v712 = vpop.permute.xlu0 %711
        %715 = vset.pattern.permute.xlu0 0
        %716 = vperm.xlu0 %715, %v694
        %v717 = vpop.permute.xlu0 %716
        %720 = vset.pattern.permute.xlu0 0
        %721 = vperm.xlu0 %720, %v695
        %v722 = vpop.permute.xlu0 %721
        %725 = vset.pattern.permute.xlu0 0
        %726 = vperm.xlu0 %725, %v696
        %v727 = vpop.permute.xlu0 %726
        %730 = vset.pattern.permute.xlu0 0
        %731 = vperm.xlu0 %730, %v697
        %v732 = vpop.permute.xlu0 %731
        %735 = vset.pattern.permute.xlu0 0
        %736 = vperm.xlu0 %735, %v698
        %v737 = vpop.permute.xlu0 %736
        %740 = vset.pattern.permute.xlu0 0
        %741 = vperm.xlu0 %740, %v699
        %v742 = vpop.permute.xlu0 %741
        %745 = vset.pattern.permute.xlu0 0
        %746 = vperm.xlu0 %745, %v700
        %v747 = vpop.permute.xlu0 %746
        %750 = vset.pattern.permute.xlu0 0
        %751 = vperm.xlu0 %750, %v701
        %v752 = vpop.permute.xlu0 %751
        %755 = vset.pattern.permute.xlu0 0
        %756 = vperm.xlu0 %755, %v702
        %v757 = vpop.permute.xlu0 %756
        %760 = vset.pattern.permute.xlu0 0
        %761 = vperm.xlu0 %760, %v703
        %v762 = vpop.permute.xlu0 %761
        %765 = vset.pattern.permute.xlu0 0
        %766 = vperm.xlu0 %765, %v704
        %v767 = vpop.permute.xlu0 %766
        %770 = vset.pattern.permute.xlu0 0
        %771 = vperm.xlu0 %770, %v705
        %v772 = vpop.permute.xlu0 %771
        %775 = vset.pattern.permute.xlu0 0
        %776 = vperm.xlu0 %775, %v706
        %v777 = vpop.permute.xlu0 %776
        %780 = vset.pattern.permute.xlu0 0
        %781 = vperm.xlu0 %780, %v707
        %v782 = vpop.permute.xlu0 %781
        %785 = vset.pattern.permute.xlu0 0
        %786 = vperm.xlu0 %785, %v708
        %v787 = vpop.permute.xlu0 %786
        %789 = vmatprep.subr.mxu0 0.0
        %790 = vmatpush1.msra.mxu0 %v399
        %791 = vmatprep.subr.mxu0 0.0
        %792 = vmatpush1.msra.mxu0 %v398
        %793 = vmatprep.subr.mxu0 0.0
        %794 = vmatpush1.msra.mxu0 %v397
        %795 = vmatprep.subr.mxu0 0.0
        %796 = vmatpush1.msra.mxu0 %v396
        %797 = vmatprep.subr.mxu0 0.0
        %798 = vmatpush1.msra.mxu0 %v395
        %799 = vmatprep.subr.mxu0 0.0
        %800 = vmatpush1.msra.mxu0 %v394
        %801 = vmatprep.subr.mxu0 0.0
        %802 = vmatpush1.msra.mxu0 %v393
        %803 = vmatprep.subr.mxu0 0.0
        %804 = vmatpush1.msra.mxu0 %v392
        %805 = vmatprep.subr.mxu0 0.0
        %806 = vmatpush1.msra.mxu0 %v391
        %807 = vmatprep.subr.mxu0 0.0
        %808 = vmatpush1.msra.mxu0 %v390
        %809 = vmatprep.subr.mxu0 0.0
        %810 = vmatpush1.msra.mxu0 %v389
        %811 = vmatprep.subr.mxu0 0.0
        %812 = vmatpush1.msra.mxu0 %v388
        %813 = vmatprep.subr.mxu0 0.0
        %814 = vmatpush1.msra.mxu0 %v387
        %815 = vmatprep.subr.mxu0 0.0
        %816 = vmatpush1.msra.mxu0 %v386
        %817 = vmatprep.subr.mxu0 0.0
        %818 = vmatpush1.msra.mxu0 %v385
        %819 = vmatprep.subr.mxu0 0.0
        %820 = vmatpush1.msra.mxu0 %v384
        %821 = vmatprep.subr.mxu0 0.0
        %822 = vmatpush2.msra.mxu0 0.0
        %823 = vmatprep.subr.mxu0 0.0
        %824 = vmatpush2.msra.mxu0 0.0
        %825 = vmatprep.subr.mxu0 0.0
        %826 = vmatpush2.msra.mxu0 0.0
        %827 = vmatprep.subr.mxu0 0.0
        %828 = vmatpush2.msra.mxu0 0.0
        %829 = vmatprep.subr.mxu0 0.0
        %830 = vmatpush2.msra.mxu0 0.0
        %831 = vmatprep.subr.mxu0 0.0
        %832 = vmatpush2.msra.mxu0 0.0
        %833 = vmatprep.subr.mxu0 0.0
        %834 = vmatpush2.msra.mxu0 0.0
        %835 = vmatprep.subr.mxu0 0.0
        %836 = vmatpush2.msra.mxu0 0.0
        %837 = vmatprep.subr.mxu0 0.0
        %838 = vmatpush2.msra.mxu0 0.0
        %839 = vmatprep.subr.mxu0 0.0
        %840 = vmatpush2.msra.mxu0 0.0
        %841 = vmatprep.subr.mxu0 0.0
        %842 = vmatpush2.msra.mxu0 0.0
        %843 = vmatprep.subr.mxu0 0.0
        %844 = vmatpush2.msra.mxu0 0.0
        %845 = vmatprep.subr.mxu0 0.0
        %846 = vmatpush2.msra.mxu0 0.0
        %847 = vmatprep.subr.mxu0 0.0
        %848 = vmatpush2.msra.mxu0 0.0
        %849 = vmatprep.subr.mxu0 0.0
        %850 = vmatpush2.msra.mxu0 0.0
        %851 = vmatprep.subr.mxu0 0.0
        %852 = vmatpush2.msra.mxu0 0.0
        %853 = vmatprep.mubr.f32.mxu0 0.0
        %854 = vmatmul.mubr.f32.gmra.mxu0 %v676
        %v855 = vpop.f32.mrf.mxu0
        %v856 = vadd.f32 %v712, %v855
        %v857 = vpop.f32.mrf.mxu0
        %858 = vmatprep.mubr.f32.mxu0 0.0
        %859 = vmatmul.mubr.f32.gmra.mxu0 %v677
        %v860 = vpop.f32.mrf.mxu0
        %v861 = vadd.f32 %v717, %v860
        %v862 = vpop.f32.mrf.mxu0
        %863 = vmatprep.mubr.f32.mxu0 0.0
        %864 = vmatmul.mubr.f32.gmra.mxu0 %v678
        %v865 = vpop.f32.mrf.mxu0
        %v866 = vadd.f32 %v722, %v865
        %v867 = vpop.f32.mrf.mxu0
        %868 = vmatprep.mubr.f32.mxu0 0.0
        %869 = vmatmul.mubr.f32.gmra.mxu0 %v679
        %v870 = vpop.f32.mrf.mxu0
        %v871 = vadd.f32 %v727, %v870
        %v872 = vpop.f32.mrf.mxu0
        %873 = vmatprep.mubr.f32.mxu0 0.0
        %874 = vmatmul.mubr.f32.gmra.mxu0 %v680
        %v875 = vpop.f32.mrf.mxu0
        %v876 = vadd.f32 %v732, %v875
        %v877 = vpop.f32.mrf.mxu0
        %878 = vmatprep.mubr.f32.mxu0 0.0
        %879 = vmatmul.mubr.f32.gmra.mxu0 %v681
        %v880 = vpop.f32.mrf.mxu0
        %v881 = vadd.f32 %v737, %v880
        %v882 = vpop.f32.mrf.mxu0
        %883 = vmatprep.mubr.f32.mxu0 0.0
        %884 = vmatmul.mubr.f32.gmra.mxu0 %v682
        %v885 = vpop.f32.mrf.mxu0
        %v886 = vadd.f32 %v742, %v885
        %v887 = vpop.f32.mrf.mxu0
        %888 = vmatprep.mubr.f32.mxu0 0.0
        %889 = vmatmul.mubr.f32.gmra.mxu0 %v683
        %v890 = vpop.f32.mrf.mxu0
        %v891 = vadd.f32 %v747, %v890
        %v892 = vpop.f32.mrf.mxu0
        %893 = vmatprep.mubr.f32.mxu0 0.0
        %894 = vmatmul.mubr.f32.gmra.mxu0 %v684
        %v895 = vpop.f32.mrf.mxu0
        %v896 = vadd.f32 %v752, %v895
        %v897 = vpop.f32.mrf.mxu0
        %898 = vmatprep.mubr.f32.mxu0 0.0
        %899 = vmatmul.mubr.f32.gmra.mxu0 %v685
        %v900 = vpop.f32.mrf.mxu0
        %v901 = vadd.f32 %v757, %v900
        %v902 = vpop.f32.mrf.mxu0
        %903 = vmatprep.mubr.f32.mxu0 0.0
        %904 = vmatmul.mubr.f32.gmra.mxu0 %v686
        %v905 = vpop.f32.mrf.mxu0
        %v906 = vadd.f32 %v762, %v905
        %v907 = vpop.f32.mrf.mxu0
        %908 = vmatprep.mubr.f32.mxu0 0.0
        %909 = vmatmul.mubr.f32.gmra.mxu0 %v687
        %v910 = vpop.f32.mrf.mxu0
        %v911 = vadd.f32 %v767, %v910
        %v912 = vpop.f32.mrf.mxu0
        %913 = vmatprep.mubr.f32.mxu0 0.0
        %914 = vmatmul.mubr.f32.gmra.mxu0 %v688
        %v915 = vpop.f32.mrf.mxu0
        %v916 = vadd.f32 %v772, %v915
        %v917 = vpop.f32.mrf.mxu0
        %918 = vmatprep.mubr.f32.mxu0 0.0
        %919 = vmatmul.mubr.f32.gmra.mxu0 %v689
        %v920 = vpop.f32.mrf.mxu0
        %v921 = vadd.f32 %v777, %v920
        %v922 = vpop.f32.mrf.mxu0
        %923 = vmatprep.mubr.f32.mxu0 0.0
        %924 = vmatmul.mubr.f32.gmra.mxu0 %v690
        %v925 = vpop.f32.mrf.mxu0
        %v926 = vadd.f32 %v782, %v925
        %v927 = vpop.f32.mrf.mxu0
        %928 = vmatprep.mubr.f32.mxu0 0.0
        %929 = vmatmul.mubr.f32.gmra.mxu0 %v691
        %v930 = vpop.f32.mrf.mxu0
        %v931 = vadd.f32 %v787, %v930
        %v932 = vpop.f32.mrf.mxu0
        %933 = vdwg.mxu0
        %v934 = vxor.u32 %v856, 2147483648
        %v935 = vxor.u32 %v861, 2147483648
        %v936 = vxor.u32 %v866, 2147483648
        %v937 = vxor.u32 %v871, 2147483648
        %v938 = vxor.u32 %v876, 2147483648
        %v939 = vxor.u32 %v881, 2147483648
        %v940 = vxor.u32 %v886, 2147483648
        %v941 = vxor.u32 %v891, 2147483648
        %v942 = vxor.u32 %v896, 2147483648
        %v943 = vxor.u32 %v901, 2147483648
        %v944 = vxor.u32 %v906, 2147483648
        %v945 = vxor.u32 %v911, 2147483648
        %v946 = vxor.u32 %v916, 2147483648
        %v947 = vxor.u32 %v921, 2147483648
        %v948 = vxor.u32 %v926, 2147483648
        %v949 = vxor.u32 %v931, 2147483648
        %v950 = vmul.f32 %v934, 1.442695
        %v951 = vpow.pop %v950
        %v952 = vmul.f32 %v935, 1.442695
        %v953 = vpow.pop %v952
        %v954 = vmul.f32 %v936, 1.442695
        %v955 = vpow.pop %v954
        %v956 = vmul.f32 %v937, 1.442695
        %v957 = vpow.pop %v956
        %v958 = vmul.f32 %v938, 1.442695
        %v959 = vpow.pop %v958
        %v960 = vmul.f32 %v939, 1.442695
        %v961 = vpow.pop %v960
        %v962 = vmul.f32 %v940, 1.442695
        %v963 = vpow.pop %v962
        %v964 = vmul.f32 %v941, 1.442695
        %v965 = vpow.pop %v964
        %v966 = vmul.f32 %v942, 1.442695
        %v967 = vpow.pop %v966
        %v968 = vmul.f32 %v943, 1.442695
        %v969 = vpow.pop %v968
        %v970 = vmul.f32 %v944, 1.442695
        %v971 = vpow.pop %v970
        %v972 = vmul.f32 %v945, 1.442695
        %v973 = vpow.pop %v972
        %v974 = vmul.f32 %v946, 1.442695
        %v975 = vpow.pop %v974
        %v976 = vmul.f32 %v947, 1.442695
        %v977 = vpow.pop %v976
        %v978 = vmul.f32 %v948, 1.442695
        %v979 = vpow.pop %v978
        %v980 = vmul.f32 %v949, 1.442695
        %v981 = vpow.pop %v980
        %v982 = vadd.f32 %v951, 1.0
        %v983 = vadd.f32 %v953, 1.0
        %v984 = vadd.f32 %v955, 1.0
        %v985 = vadd.f32 %v957, 1.0
        %v986 = vadd.f32 %v959, 1.0
        %v987 = vadd.f32 %v961, 1.0
        %v988 = vadd.f32 %v963, 1.0
        %v989 = vadd.f32 %v965, 1.0
        %v990 = vadd.f32 %v967, 1.0
        %v991 = vadd.f32 %v969, 1.0
        %v992 = vadd.f32 %v971, 1.0
        %v993 = vadd.f32 %v973, 1.0
        %v994 = vadd.f32 %v975, 1.0
        %v995 = vadd.f32 %v977, 1.0
        %v996 = vadd.f32 %v979, 1.0
        %v997 = vadd.f32 %v981, 1.0
        %v998 = vrcp.pop %v982
        %v999 = vmul.f32 1.0, %v998
        %v1000 = vrcp.pop %v983
        %v1001 = vmul.f32 1.0, %v1000
        %v1002 = vrcp.pop %v984
        %v1003 = vmul.f32 1.0, %v1002
        %v1004 = vrcp.pop %v985
        %v1005 = vmul.f32 1.0, %v1004
        %v1006 = vrcp.pop %v986
        %v1007 = vmul.f32 1.0, %v1006
        %v1008 = vrcp.pop %v987
        %v1009 = vmul.f32 1.0, %v1008
        %v1010 = vrcp.pop %v988
        %v1011 = vmul.f32 1.0, %v1010
        %v1012 = vrcp.pop %v989
        %v1013 = vmul.f32 1.0, %v1012
        %v1014 = vrcp.pop %v990
        %v1015 = vmul.f32 1.0, %v1014
        %v1016 = vrcp.pop %v991
        %v1017 = vmul.f32 1.0, %v1016
        %v1018 = vrcp.pop %v992
        %v1019 = vmul.f32 1.0, %v1018
        %v1020 = vrcp.pop %v993
        %v1021 = vmul.f32 1.0, %v1020
        %v1022 = vrcp.pop %v994
        %v1023 = vmul.f32 1.0, %v1022
        %v1024 = vrcp.pop %v995
        %v1025 = vmul.f32 1.0, %v1024
        %v1026 = vrcp.pop %v996
        %v1027 = vmul.f32 1.0, %v1026
        %v1028 = vrcp.pop %v997
        %v1029 = vmul.f32 1.0, %v1028
        %v1030 = vmul.f32 %v659, %v999
        %v1031 = vmul.f32 %v660, %v1001
        %v1032 = vmul.f32 %v661, %v1003
        %v1033 = vmul.f32 %v662, %v1005
        %v1034 = vmul.f32 %v663, %v1007
        %v1035 = vmul.f32 %v664, %v1009
        %v1036 = vmul.f32 %v665, %v1011
        %v1037 = vmul.f32 %v666, %v1013
        %v1038 = vmul.f32 %v667, %v1015
        %v1039 = vmul.f32 %v668, %v1017
        %v1040 = vmul.f32 %v669, %v1019
        %v1041 = vmul.f32 %v670, %v1021
        %v1042 = vmul.f32 %v671, %v1023
        %v1043 = vmul.f32 %v672, %v1025
        %v1044 = vmul.f32 %v673, %v1027
        %v1045 = vmul.f32 %v674, %v1029
        %s1046 = scalar_lea.vmem %s7, 8
        %v1047 = vld [vmem:[%s1046] sm:$0xff]
        %s1048 = scalar_lea.vmem %s8, 8
        %v1049 = vld [vmem:[%s1048] sm:$0xff]
        %1051 = vset.pattern.permute.xlu0 0
        %1052 = vperm.xlu0 %1051, %v1049
        %v1053 = vpop.permute.xlu0 %1052
        %1055 = vmatprep.subr.mxu0 0.0
        %1056 = vmatpush1.msra.mxu0 %v1045
        %1057 = vmatprep.subr.mxu0 0.0
        %1058 = vmatpush1.msra.mxu0 %v1044
        %1059 = vmatprep.subr.mxu0 0.0
        %1060 = vmatpush1.msra.mxu0 %v1043
        %1061 = vmatprep.subr.mxu0 0.0
        %1062 = vmatpush1.msra.mxu0 %v1042
        %1063 = vmatprep.subr.mxu0 0.0
        %1064 = vmatpush1.msra.mxu0 %v1041
        %1065 = vmatprep.subr.mxu0 0.0
        %1066 = vmatpush1.msra.mxu0 %v1040
        %1067 = vmatprep.subr.mxu0 0.0
        %1068 = vmatpush1.msra.mxu0 %v1039
        %1069 = vmatprep.subr.mxu0 0.0
        %1070 = vmatpush1.msra.mxu0 %v1038
        %1071 = vmatprep.subr.mxu0 0.0
        %1072 = vmatpush1.msra.mxu0 %v1037
        %1073 = vmatprep.subr.mxu0 0.0
        %1074 = vmatpush1.msra.mxu0 %v1036
        %1075 = vmatprep.subr.mxu0 0.0
        %1076 = vmatpush1.msra.mxu0 %v1035
        %1077 = vmatprep.subr.mxu0 0.0
        %1078 = vmatpush1.msra.mxu0 %v1034
        %1079 = vmatprep.subr.mxu0 0.0
        %1080 = vmatpush1.msra.mxu0 %v1033
        %1081 = vmatprep.subr.mxu0 0.0
        %1082 = vmatpush1.msra.mxu0 %v1032
        %1083 = vmatprep.subr.mxu0 0.0
        %1084 = vmatpush1.msra.mxu0 %v1031
        %1085 = vmatprep.subr.mxu0 0.0
        %1086 = vmatpush1.msra.mxu0 %v1030
        %1087 = vmatprep.subr.mxu0 0.0
        %1088 = vmatpush2.msra.mxu0 0.0
        %1089 = vmatprep.subr.mxu0 0.0
        %1090 = vmatpush2.msra.mxu0 0.0
        %1091 = vmatprep.subr.mxu0 0.0
        %1092 = vmatpush2.msra.mxu0 0.0
        %1093 = vmatprep.subr.mxu0 0.0
        %1094 = vmatpush2.msra.mxu0 0.0
        %1095 = vmatprep.subr.mxu0 0.0
        %1096 = vmatpush2.msra.mxu0 0.0
        %1097 = vmatprep.subr.mxu0 0.0
        %1098 = vmatpush2.msra.mxu0 0.0
        %1099 = vmatprep.subr.mxu0 0.0
        %1100 = vmatpush2.msra.mxu0 0.0
        %1101 = vmatprep.subr.mxu0 0.0
        %1102 = vmatpush2.msra.mxu0 0.0
        %1103 = vmatprep.subr.mxu0 0.0
        %1104 = vmatpush2.msra.mxu0 0.0
        %1105 = vmatprep.subr.mxu0 0.0
        %1106 = vmatpush2.msra.mxu0 0.0
        %1107 = vmatprep.subr.mxu0 0.0
        %1108 = vmatpush2.msra.mxu0 0.0
        %1109 = vmatprep.subr.mxu0 0.0
        %1110 = vmatpush2.msra.mxu0 0.0
        %1111 = vmatprep.subr.mxu0 0.0
        %1112 = vmatpush2.msra.mxu0 0.0
        %1113 = vmatprep.subr.mxu0 0.0
        %1114 = vmatpush2.msra.mxu0 0.0
        %1115 = vmatprep.subr.mxu0 0.0
        %1116 = vmatpush2.msra.mxu0 0.0
        %1117 = vmatprep.subr.mxu0 0.0
        %1118 = vmatpush2.msra.mxu0 0.0
        %1119 = vmatprep.mubr.f32.mxu0 0.0
        %1120 = vmatmul.mubr.f32.gmra.mxu0 %v1047
        %v1121 = vpop.f32.mrf.mxu0
        %v1122 = vadd.f32 %v1053, %v1121
        %v1123 = vpop.f32.mrf.mxu0
        %1124 = vdwg.mxu0
        %v1125 = vsub.f32 %v381, %v1122
        %v1126 = vsub.f32 0.0, %v1122
        %v1127 = vmul.f32 %v1126, 1.442695
        %v1128 = vpow.pop %v1127
        %v1130 = vrot.slane %v1128, 4
        %v1132 = vmul.f32 %v1125, %v1130
        %vm1133 = vcmask 1043456
        %v1134 = vsel %vm1133, %v381, %v1132
        %s1135 = scalar_lea.vmem %s2, 8
        %v1136 = vld [vmem:[%s1135] sm:$0xff]
        %vm1137 = vcmask 64512
        %v1139 = vsel %vm1137, %v1136, 0
        %1141 = vmatprep.subr.mxu0 0.0
        %1142 = vmatpush1.msra.mxu0 0.0
        %1143 = vmatprep.subr.mxu0 0.0
        %1144 = vmatpush1.msra.mxu0 0.0
        %1145 = vmatprep.subr.mxu0 0.0
        %1146 = vmatpush1.msra.mxu0 0.0
        %1147 = vmatprep.subr.mxu0 0.0
        %1148 = vmatpush1.msra.mxu0 0.0
        %1149 = vmatprep.subr.mxu0 0.0
        %1150 = vmatpush1.msra.mxu0 0.0
        %1151 = vmatprep.subr.mxu0 0.0
        %1152 = vmatpush1.msra.mxu0 0.0
        %1153 = vmatprep.subr.mxu0 0.0
        %1154 = vmatpush1.msra.mxu0 0.0
        %1155 = vmatprep.subr.mxu0 0.0
        %1156 = vmatpush1.msra.mxu0 0.0
        %1157 = vmatprep.subr.mxu0 0.0
        %1158 = vmatpush1.msra.mxu0 0.0
        %1159 = vmatprep.subr.mxu0 0.0
        %1160 = vmatpush1.msra.mxu0 0.0
        %1161 = vmatprep.subr.mxu0 0.0
        %1162 = vmatpush1.msra.mxu0 0.0
        %1163 = vmatprep.subr.mxu0 0.0
        %1164 = vmatpush1.msra.mxu0 0.0
        %1165 = vmatprep.subr.mxu0 0.0
        %1166 = vmatpush1.msra.mxu0 0.0
        %1167 = vmatprep.subr.mxu0 0.0
        %1168 = vmatpush1.msra.mxu0 0.0
        %1169 = vmatprep.subr.mxu0 0.0
        %1170 = vmatpush1.msra.mxu0 0.0
        %1171 = vmatprep.subr.mxu0 0.0
        %1172 = vmatpush1.msra.mxu0 %v1134
        %1173 = vmatprep.subr.mxu0 0.0
        %1174 = vmatpush2.msra.mxu0 0.0
        %1175 = vmatprep.subr.mxu0 0.0
        %1176 = vmatpush2.msra.mxu0 0.0
        %1177 = vmatprep.subr.mxu0 0.0
        %1178 = vmatpush2.msra.mxu0 0.0
        %1179 = vmatprep.subr.mxu0 0.0
        %1180 = vmatpush2.msra.mxu0 0.0
        %1181 = vmatprep.subr.mxu0 0.0
        %1182 = vmatpush2.msra.mxu0 0.0
        %1183 = vmatprep.subr.mxu0 0.0
        %1184 = vmatpush2.msra.mxu0 0.0
        %1185 = vmatprep.subr.mxu0 0.0
        %1186 = vmatpush2.msra.mxu0 0.0
        %1187 = vmatprep.subr.mxu0 0.0
        %1188 = vmatpush2.msra.mxu0 0.0
        %1189 = vmatprep.subr.mxu0 0.0
        %1190 = vmatpush2.msra.mxu0 0.0
        %1191 = vmatprep.subr.mxu0 0.0
        %1192 = vmatpush2.msra.mxu0 0.0
        %1193 = vmatprep.subr.mxu0 0.0
        %1194 = vmatpush2.msra.mxu0 0.0
        %1195 = vmatprep.subr.mxu0 0.0
        %1196 = vmatpush2.msra.mxu0 0.0
        %1197 = vmatprep.subr.mxu0 0.0
        %1198 = vmatpush2.msra.mxu0 0.0
        %1199 = vmatprep.subr.mxu0 0.0
        %1200 = vmatpush2.msra.mxu0 0.0
        %1201 = vmatprep.subr.mxu0 0.0
        %1202 = vmatpush2.msra.mxu0 0.0
        %1203 = vmatprep.subr.mxu0 0.0
        %1204 = vmatpush2.msra.mxu0 0.0
        %1205 = vmatprep.mubr.f32.mxu0 0.0
        %1206 = vmatmul.mubr.f32.gmra.mxu0 %v1139
        %v1207 = vpop.f32.mrf.mxu0
        %v1208 = vadd.f32 0.0, %v1207
        %v1209 = vpop.f32.mrf.mxu0
        %1210 = vdwg.mxu0
        %1211 = vst.msk [vmem:[#allocation2] sm:$0xf] %vm382, %v1208
        %v1212 = vld [vmem:[#allocation2] sm:$0xff]
        %v1213 = vld [vmem:[#allocation2 + $0x8] sm:$0xff]
        %v1214 = vld [vmem:[#allocation2 + $0x10] sm:$0xff]
        %v1215 = vld [vmem:[#allocation2 + $0x18] sm:$0xff]
        %v1216 = vld [vmem:[#allocation2 + $0x20] sm:$0xff]
        %v1217 = vld [vmem:[#allocation2 + $0x28] sm:$0xff]
        %v1218 = vld [vmem:[#allocation2 + $0x30] sm:$0xff]
        %v1219 = vld [vmem:[#allocation2 + $0x38] sm:$0xff]
        %v1220 = vld [vmem:[#allocation2 + $0x40] sm:$0xff]
        %v1221 = vld [vmem:[#allocation2 + $0x48] sm:$0xff]
        %v1222 = vld [vmem:[#allocation2 + $0x50] sm:$0xff]
        %v1223 = vld [vmem:[#allocation2 + $0x58] sm:$0xff]
        %v1224 = vld [vmem:[#allocation2 + $0x60] sm:$0xff]
        %v1225 = vld [vmem:[#allocation2 + $0x68] sm:$0xff]
        %v1226 = vld [vmem:[#allocation2 + $0x70] sm:$0xff]
        %v1227 = vld [vmem:[#allocation2 + $0x78] sm:$0xff]
        %v1228 = vld [vmem:[%s3] sm:$0xff]
        %v1229 = vld [vmem:[%s3 + $0x8] sm:$0xff]
        %v1230 = vld [vmem:[%s3 + $0x10] sm:$0xff]
        %v1231 = vld [vmem:[%s3 + $0x18] sm:$0xff]
        %v1232 = vld [vmem:[%s3 + $0x20] sm:$0xff]
        %v1233 = vld [vmem:[%s3 + $0x28] sm:$0xff]
        %v1234 = vld [vmem:[%s3 + $0x30] sm:$0xff]
        %v1235 = vld [vmem:[%s3 + $0x38] sm:$0xff]
        %v1236 = vld [vmem:[%s3 + $0x40] sm:$0xff]
        %v1237 = vld [vmem:[%s3 + $0x48] sm:$0xff]
        %v1238 = vld [vmem:[%s3 + $0x50] sm:$0xff]
        %v1239 = vld [vmem:[%s3 + $0x58] sm:$0xff]
        %v1240 = vld [vmem:[%s3 + $0x60] sm:$0xff]
        %v1241 = vld [vmem:[%s3 + $0x68] sm:$0xff]
        %v1242 = vld [vmem:[%s3 + $0x70] sm:$0xff]
        %v1243 = vld [vmem:[%s3 + $0x78] sm:$0xff]
        %v1244 = vld [vmem:[%s4] sm:$0xff]
        %v1245 = vld [vmem:[%s4 + $0x8] sm:$0xff]
        %v1246 = vld [vmem:[%s4 + $0x10] sm:$0xff]
        %v1247 = vld [vmem:[%s4 + $0x18] sm:$0xff]
        %v1248 = vld [vmem:[%s4 + $0x20] sm:$0xff]
        %v1249 = vld [vmem:[%s4 + $0x28] sm:$0xff]
        %v1250 = vld [vmem:[%s4 + $0x30] sm:$0xff]
        %v1251 = vld [vmem:[%s4 + $0x38] sm:$0xff]
        %v1252 = vld [vmem:[%s4 + $0x40] sm:$0xff]
        %v1253 = vld [vmem:[%s4 + $0x48] sm:$0xff]
        %v1254 = vld [vmem:[%s4 + $0x50] sm:$0xff]
        %v1255 = vld [vmem:[%s4 + $0x58] sm:$0xff]
        %v1256 = vld [vmem:[%s4 + $0x60] sm:$0xff]
        %v1257 = vld [vmem:[%s4 + $0x68] sm:$0xff]
        %v1258 = vld [vmem:[%s4 + $0x70] sm:$0xff]
        %v1259 = vld [vmem:[%s4 + $0x78] sm:$0xff]
        %1261 = vset.pattern.permute.xlu0 0
        %1262 = vperm.xlu0 %1261, %v1244
        %v1263 = vpop.permute.xlu0 %1262
        %1266 = vset.pattern.permute.xlu0 0
        %1267 = vperm.xlu0 %1266, %v1245
        %v1268 = vpop.permute.xlu0 %1267
        %1271 = vset.pattern.permute.xlu0 0
        %1272 = vperm.xlu0 %1271, %v1246
        %v1273 = vpop.permute.xlu0 %1272
        %1276 = vset.pattern.permute.xlu0 0
        %1277 = vperm.xlu0 %1276, %v1247
        %v1278 = vpop.permute.xlu0 %1277
        %1281 = vset.pattern.permute.xlu0 0
        %1282 = vperm.xlu0 %1281, %v1248
        %v1283 = vpop.permute.xlu0 %1282
        %1286 = vset.pattern.permute.xlu0 0
        %1287 = vperm.xlu0 %1286, %v1249
        %v1288 = vpop.permute.xlu0 %1287
        %1291 = vset.pattern.permute.xlu0 0
        %1292 = vperm.xlu0 %1291, %v1250
        %v1293 = vpop.permute.xlu0 %1292
        %1296 = vset.pattern.permute.xlu0 0
        %1297 = vperm.xlu0 %1296, %v1251
        %v1298 = vpop.permute.xlu0 %1297
        %1301 = vset.pattern.permute.xlu0 0
        %1302 = vperm.xlu0 %1301, %v1252
        %v1303 = vpop.permute.xlu0 %1302
        %1306 = vset.pattern.permute.xlu0 0
        %1307 = vperm.xlu0 %1306, %v1253
        %v1308 = vpop.permute.xlu0 %1307
        %1311 = vset.pattern.permute.xlu0 0
        %1312 = vperm.xlu0 %1311, %v1254
        %v1313 = vpop.permute.xlu0 %1312
        %1316 = vset.pattern.permute.xlu0 0
        %1317 = vperm.xlu0 %1316, %v1255
        %v1318 = vpop.permute.xlu0 %1317
        %1321 = vset.pattern.permute.xlu0 0
        %1322 = vperm.xlu0 %1321, %v1256
        %v1323 = vpop.permute.xlu0 %1322
        %1326 = vset.pattern.permute.xlu0 0
        %1327 = vperm.xlu0 %1326, %v1257
        %v1328 = vpop.permute.xlu0 %1327
        %1331 = vset.pattern.permute.xlu0 0
        %1332 = vperm.xlu0 %1331, %v1258
        %v1333 = vpop.permute.xlu0 %1332
        %1336 = vset.pattern.permute.xlu0 0
        %1337 = vperm.xlu0 %1336, %v1259
        %v1338 = vpop.permute.xlu0 %1337
        %1340 = vmatprep.subr.mxu0 0.0
        %1341 = vmatpush1.msra.mxu0 %v1227
        %1342 = vmatprep.subr.mxu0 0.0
        %1343 = vmatpush1.msra.mxu0 %v1226
        %1344 = vmatprep.subr.mxu0 0.0
        %1345 = vmatpush1.msra.mxu0 %v1225
        %1346 = vmatprep.subr.mxu0 0.0
        %1347 = vmatpush1.msra.mxu0 %v1224
        %1348 = vmatprep.subr.mxu0 0.0
        %1349 = vmatpush1.msra.mxu0 %v1223
        %1350 = vmatprep.subr.mxu0 0.0
        %1351 = vmatpush1.msra.mxu0 %v1222
        %1352 = vmatprep.subr.mxu0 0.0
        %1353 = vmatpush1.msra.mxu0 %v1221
        %1354 = vmatprep.subr.mxu0 0.0
        %1355 = vmatpush1.msra.mxu0 %v1220
        %1356 = vmatprep.subr.mxu0 0.0
        %1357 = vmatpush1.msra.mxu0 %v1219
        %1358 = vmatprep.subr.mxu0 0.0
        %1359 = vmatpush1.msra.mxu0 %v1218
        %1360 = vmatprep.subr.mxu0 0.0
        %1361 = vmatpush1.msra.mxu0 %v1217
        %1362 = vmatprep.subr.mxu0 0.0
        %1363 = vmatpush1.msra.mxu0 %v1216
        %1364 = vmatprep.subr.mxu0 0.0
        %1365 = vmatpush1.msra.mxu0 %v1215
        %1366 = vmatprep.subr.mxu0 0.0
        %1367 = vmatpush1.msra.mxu0 %v1214
        %1368 = vmatprep.subr.mxu0 0.0
        %1369 = vmatpush1.msra.mxu0 %v1213
        %1370 = vmatprep.subr.mxu0 0.0
        %1371 = vmatpush1.msra.mxu0 %v1212
        %1372 = vmatprep.subr.mxu0 0.0
        %1373 = vmatpush2.msra.mxu0 0.0
        %1374 = vmatprep.subr.mxu0 0.0
        %1375 = vmatpush2.msra.mxu0 0.0
        %1376 = vmatprep.subr.mxu0 0.0
        %1377 = vmatpush2.msra.mxu0 0.0
        %1378 = vmatprep.subr.mxu0 0.0
        %1379 = vmatpush2.msra.mxu0 0.0
        %1380 = vmatprep.subr.mxu0 0.0
        %1381 = vmatpush2.msra.mxu0 0.0
        %1382 = vmatprep.subr.mxu0 0.0
        %1383 = vmatpush2.msra.mxu0 0.0
        %1384 = vmatprep.subr.mxu0 0.0
        %1385 = vmatpush2.msra.mxu0 0.0
        %1386 = vmatprep.subr.mxu0 0.0
        %1387 = vmatpush2.msra.mxu0 0.0
        %1388 = vmatprep.subr.mxu0 0.0
        %1389 = vmatpush2.msra.mxu0 0.0
        %1390 = vmatprep.subr.mxu0 0.0
        %1391 = vmatpush2.msra.mxu0 0.0
        %1392 = vmatprep.subr.mxu0 0.0
        %1393 = vmatpush2.msra.mxu0 0.0
        %1394 = vmatprep.subr.mxu0 0.0
        %1395 = vmatpush2.msra.mxu0 0.0
        %1396 = vmatprep.subr.mxu0 0.0
        %1397 = vmatpush2.msra.mxu0 0.0
        %1398 = vmatprep.subr.mxu0 0.0
        %1399 = vmatpush2.msra.mxu0 0.0
        %1400 = vmatprep.subr.mxu0 0.0
        %1401 = vmatpush2.msra.mxu0 0.0
        %1402 = vmatprep.subr.mxu0 0.0
        %1403 = vmatpush2.msra.mxu0 0.0
        %1404 = vmatprep.mubr.f32.mxu0 0.0
        %1405 = vmatmul.mubr.f32.gmra.mxu0 %v1228
        %v1406 = vpop.f32.mrf.mxu0
        %v1407 = vadd.f32 %v1263, %v1406
        %v1408 = vpop.f32.mrf.mxu0
        %1409 = vmatprep.mubr.f32.mxu0 0.0
        %1410 = vmatmul.mubr.f32.gmra.mxu0 %v1229
        %v1411 = vpop.f32.mrf.mxu0
        %v1412 = vadd.f32 %v1268, %v1411
        %v1413 = vpop.f32.mrf.mxu0
        %1414 = vmatprep.mubr.f32.mxu0 0.0
        %1415 = vmatmul.mubr.f32.gmra.mxu0 %v1230
        %v1416 = vpop.f32.mrf.mxu0
        %v1417 = vadd.f32 %v1273, %v1416
        %v1418 = vpop.f32.mrf.mxu0
        %1419 = vmatprep.mubr.f32.mxu0 0.0
        %1420 = vmatmul.mubr.f32.gmra.mxu0 %v1231
        %v1421 = vpop.f32.mrf.mxu0
        %v1422 = vadd.f32 %v1278, %v1421
        %v1423 = vpop.f32.mrf.mxu0
        %1424 = vmatprep.mubr.f32.mxu0 0.0
        %1425 = vmatmul.mubr.f32.gmra.mxu0 %v1232
        %v1426 = vpop.f32.mrf.mxu0
        %v1427 = vadd.f32 %v1283, %v1426
        %v1428 = vpop.f32.mrf.mxu0
        %1429 = vmatprep.mubr.f32.mxu0 0.0
        %1430 = vmatmul.mubr.f32.gmra.mxu0 %v1233
        %v1431 = vpop.f32.mrf.mxu0
        %v1432 = vadd.f32 %v1288, %v1431
        %v1433 = vpop.f32.mrf.mxu0
        %1434 = vmatprep.mubr.f32.mxu0 0.0
        %1435 = vmatmul.mubr.f32.gmra.mxu0 %v1234
        %v1436 = vpop.f32.mrf.mxu0
        %v1437 = vadd.f32 %v1293, %v1436
        %v1438 = vpop.f32.mrf.mxu0
        %1439 = vmatprep.mubr.f32.mxu0 0.0
        %1440 = vmatmul.mubr.f32.gmra.mxu0 %v1235
        %v1441 = vpop.f32.mrf.mxu0
        %v1442 = vadd.f32 %v1298, %v1441
        %v1443 = vpop.f32.mrf.mxu0
        %1444 = vmatprep.mubr.f32.mxu0 0.0
        %1445 = vmatmul.mubr.f32.gmra.mxu0 %v1236
        %v1446 = vpop.f32.mrf.mxu0
        %v1447 = vadd.f32 %v1303, %v1446
        %v1448 = vpop.f32.mrf.mxu0
        %1449 = vmatprep.mubr.f32.mxu0 0.0
        %1450 = vmatmul.mubr.f32.gmra.mxu0 %v1237
        %v1451 = vpop.f32.mrf.mxu0
        %v1452 = vadd.f32 %v1308, %v1451
        %v1453 = vpop.f32.mrf.mxu0
        %1454 = vmatprep.mubr.f32.mxu0 0.0
        %1455 = vmatmul.mubr.f32.gmra.mxu0 %v1238
        %v1456 = vpop.f32.mrf.mxu0
        %v1457 = vadd.f32 %v1313, %v1456
        %v1458 = vpop.f32.mrf.mxu0
        %1459 = vmatprep.mubr.f32.mxu0 0.0
        %1460 = vmatmul.mubr.f32.gmra.mxu0 %v1239
        %v1461 = vpop.f32.mrf.mxu0
        %v1462 = vadd.f32 %v1318, %v1461
        %v1463 = vpop.f32.mrf.mxu0
        %1464 = vmatprep.mubr.f32.mxu0 0.0
        %1465 = vmatmul.mubr.f32.gmra.mxu0 %v1240
        %v1466 = vpop.f32.mrf.mxu0
        %v1467 = vadd.f32 %v1323, %v1466
        %v1468 = vpop.f32.mrf.mxu0
        %1469 = vmatprep.mubr.f32.mxu0 0.0
        %1470 = vmatmul.mubr.f32.gmra.mxu0 %v1241
        %v1471 = vpop.f32.mrf.mxu0
        %v1472 = vadd.f32 %v1328, %v1471
        %v1473 = vpop.f32.mrf.mxu0
        %1474 = vmatprep.mubr.f32.mxu0 0.0
        %1475 = vmatmul.mubr.f32.gmra.mxu0 %v1242
        %v1476 = vpop.f32.mrf.mxu0
        %v1477 = vadd.f32 %v1333, %v1476
        %v1478 = vpop.f32.mrf.mxu0
        %1479 = vmatprep.mubr.f32.mxu0 0.0
        %1480 = vmatmul.mubr.f32.gmra.mxu0 %v1243
        %v1481 = vpop.f32.mrf.mxu0
        %v1482 = vadd.f32 %v1338, %v1481
        %v1483 = vpop.f32.mrf.mxu0
        %1484 = vdwg.mxu0
        %v1485 = vtanh.pop %v1407
        %v1486 = vtanh.pop %v1412
        %v1487 = vtanh.pop %v1417
        %v1488 = vtanh.pop %v1422
        %v1489 = vtanh.pop %v1427
        %v1490 = vtanh.pop %v1432
        %v1491 = vtanh.pop %v1437
        %v1492 = vtanh.pop %v1442
        %v1493 = vtanh.pop %v1447
        %v1494 = vtanh.pop %v1452
        %v1495 = vtanh.pop %v1457
        %v1496 = vtanh.pop %v1462
        %v1497 = vtanh.pop %v1467
        %v1498 = vtanh.pop %v1472
        %v1499 = vtanh.pop %v1477
        %v1500 = vtanh.pop %v1482
        %v1501 = vld [vmem:[%s5] sm:$0xff]
        %v1502 = vld [vmem:[%s5 + $0x8] sm:$0xff]
        %v1503 = vld [vmem:[%s5 + $0x10] sm:$0xff]
        %v1504 = vld [vmem:[%s5 + $0x18] sm:$0xff]
        %v1505 = vld [vmem:[%s5 + $0x20] sm:$0xff]
        %v1506 = vld [vmem:[%s5 + $0x28] sm:$0xff]
        %v1507 = vld [vmem:[%s5 + $0x30] sm:$0xff]
        %v1508 = vld [vmem:[%s5 + $0x38] sm:$0xff]
        %v1509 = vld [vmem:[%s5 + $0x40] sm:$0xff]
        %v1510 = vld [vmem:[%s5 + $0x48] sm:$0xff]
        %v1511 = vld [vmem:[%s5 + $0x50] sm:$0xff]
        %v1512 = vld [vmem:[%s5 + $0x58] sm:$0xff]
        %v1513 = vld [vmem:[%s5 + $0x60] sm:$0xff]
        %v1514 = vld [vmem:[%s5 + $0x68] sm:$0xff]
        %v1515 = vld [vmem:[%s5 + $0x70] sm:$0xff]
        %v1516 = vld [vmem:[%s5 + $0x78] sm:$0xff]
        %v1517 = vld [vmem:[%s6] sm:$0xff]
        %v1518 = vld [vmem:[%s6 + $0x8] sm:$0xff]
        %v1519 = vld [vmem:[%s6 + $0x10] sm:$0xff]
        %v1520 = vld [vmem:[%s6 + $0x18] sm:$0xff]
        %v1521 = vld [vmem:[%s6 + $0x20] sm:$0xff]
        %v1522 = vld [vmem:[%s6 + $0x28] sm:$0xff]
        %v1523 = vld [vmem:[%s6 + $0x30] sm:$0xff]
        %v1524 = vld [vmem:[%s6 + $0x38] sm:$0xff]
        %v1525 = vld [vmem:[%s6 + $0x40] sm:$0xff]
        %v1526 = vld [vmem:[%s6 + $0x48] sm:$0xff]
        %v1527 = vld [vmem:[%s6 + $0x50] sm:$0xff]
        %v1528 = vld [vmem:[%s6 + $0x58] sm:$0xff]
        %v1529 = vld [vmem:[%s6 + $0x60] sm:$0xff]
        %v1530 = vld [vmem:[%s6 + $0x68] sm:$0xff]
        %v1531 = vld [vmem:[%s6 + $0x70] sm:$0xff]
        %v1532 = vld [vmem:[%s6 + $0x78] sm:$0xff]
        %1534 = vset.pattern.permute.xlu0 0
        %1535 = vperm.xlu0 %1534, %v1517
        %v1536 = vpop.permute.xlu0 %1535
        %1539 = vset.pattern.permute.xlu0 0
        %1540 = vperm.xlu0 %1539, %v1518
        %v1541 = vpop.permute.xlu0 %1540
        %1544 = vset.pattern.permute.xlu0 0
        %1545 = vperm.xlu0 %1544, %v1519
        %v1546 = vpop.permute.xlu0 %1545
        %1549 = vset.pattern.permute.xlu0 0
        %1550 = vperm.xlu0 %1549, %v1520
        %v1551 = vpop.permute.xlu0 %1550
        %1554 = vset.pattern.permute.xlu0 0
        %1555 = vperm.xlu0 %1554, %v1521
        %v1556 = vpop.permute.xlu0 %1555
        %1559 = vset.pattern.permute.xlu0 0
        %1560 = vperm.xlu0 %1559, %v1522
        %v1561 = vpop.permute.xlu0 %1560
        %1564 = vset.pattern.permute.xlu0 0
        %1565 = vperm.xlu0 %1564, %v1523
        %v1566 = vpop.permute.xlu0 %1565
        %1569 = vset.pattern.permute.xlu0 0
        %1570 = vperm.xlu0 %1569, %v1524
        %v1571 = vpop.permute.xlu0 %1570
        %1574 = vset.pattern.permute.xlu0 0
        %1575 = vperm.xlu0 %1574, %v1525
        %v1576 = vpop.permute.xlu0 %1575
        %1579 = vset.pattern.permute.xlu0 0
        %1580 = vperm.xlu0 %1579, %v1526
        %v1581 = vpop.permute.xlu0 %1580
        %1584 = vset.pattern.permute.xlu0 0
        %1585 = vperm.xlu0 %1584, %v1527
        %v1586 = vpop.permute.xlu0 %1585
        %1589 = vset.pattern.permute.xlu0 0
        %1590 = vperm.xlu0 %1589, %v1528
        %v1591 = vpop.permute.xlu0 %1590
        %1594 = vset.pattern.permute.xlu0 0
        %1595 = vperm.xlu0 %1594, %v1529
        %v1596 = vpop.permute.xlu0 %1595
        %1599 = vset.pattern.permute.xlu0 0
        %1600 = vperm.xlu0 %1599, %v1530
        %v1601 = vpop.permute.xlu0 %1600
        %1604 = vset.pattern.permute.xlu0 0
        %1605 = vperm.xlu0 %1604, %v1531
        %v1606 = vpop.permute.xlu0 %1605
        %1609 = vset.pattern.permute.xlu0 0
        %1610 = vperm.xlu0 %1609, %v1532
        %v1611 = vpop.permute.xlu0 %1610
        %1613 = vmatprep.subr.mxu0 0.0
        %1614 = vmatpush1.msra.mxu0 %v1227
        %1615 = vmatprep.subr.mxu0 0.0
        %1616 = vmatpush1.msra.mxu0 %v1226
        %1617 = vmatprep.subr.mxu0 0.0
        %1618 = vmatpush1.msra.mxu0 %v1225
        %1619 = vmatprep.subr.mxu0 0.0
        %1620 = vmatpush1.msra.mxu0 %v1224
        %1621 = vmatprep.subr.mxu0 0.0
        %1622 = vmatpush1.msra.mxu0 %v1223
        %1623 = vmatprep.subr.mxu0 0.0
        %1624 = vmatpush1.msra.mxu0 %v1222
        %1625 = vmatprep.subr.mxu0 0.0
        %1626 = vmatpush1.msra.mxu0 %v1221
        %1627 = vmatprep.subr.mxu0 0.0
        %1628 = vmatpush1.msra.mxu0 %v1220
        %1629 = vmatprep.subr.mxu0 0.0
        %1630 = vmatpush1.msra.mxu0 %v1219
        %1631 = vmatprep.subr.mxu0 0.0
        %1632 = vmatpush1.msra.mxu0 %v1218
        %1633 = vmatprep.subr.mxu0 0.0
        %1634 = vmatpush1.msra.mxu0 %v1217
        %1635 = vmatprep.subr.mxu0 0.0
        %1636 = vmatpush1.msra.mxu0 %v1216
        %1637 = vmatprep.subr.mxu0 0.0
        %1638 = vmatpush1.msra.mxu0 %v1215
        %1639 = vmatprep.subr.mxu0 0.0
        %1640 = vmatpush1.msra.mxu0 %v1214
        %1641 = vmatprep.subr.mxu0 0.0
        %1642 = vmatpush1.msra.mxu0 %v1213
        %1643 = vmatprep.subr.mxu0 0.0
        %1644 = vmatpush1.msra.mxu0 %v1212
        %1645 = vmatprep.subr.mxu0 0.0
        %1646 = vmatpush2.msra.mxu0 0.0
        %1647 = vmatprep.subr.mxu0 0.0
        %1648 = vmatpush2.msra.mxu0 0.0
        %1649 = vmatprep.subr.mxu0 0.0
        %1650 = vmatpush2.msra.mxu0 0.0
        %1651 = vmatprep.subr.mxu0 0.0
        %1652 = vmatpush2.msra.mxu0 0.0
        %1653 = vmatprep.subr.mxu0 0.0
        %1654 = vmatpush2.msra.mxu0 0.0
        %1655 = vmatprep.subr.mxu0 0.0
        %1656 = vmatpush2.msra.mxu0 0.0
        %1657 = vmatprep.subr.mxu0 0.0
        %1658 = vmatpush2.msra.mxu0 0.0
        %1659 = vmatprep.subr.mxu0 0.0
        %1660 = vmatpush2.msra.mxu0 0.0
        %1661 = vmatprep.subr.mxu0 0.0
        %1662 = vmatpush2.msra.mxu0 0.0
        %1663 = vmatprep.subr.mxu0 0.0
        %1664 = vmatpush2.msra.mxu0 0.0
        %1665 = vmatprep.subr.mxu0 0.0
        %1666 = vmatpush2.msra.mxu0 0.0
        %1667 = vmatprep.subr.mxu0 0.0
        %1668 = vmatpush2.msra.mxu0 0.0
        %1669 = vmatprep.subr.mxu0 0.0
        %1670 = vmatpush2.msra.mxu0 0.0
        %1671 = vmatprep.subr.mxu0 0.0
        %1672 = vmatpush2.msra.mxu0 0.0
        %1673 = vmatprep.subr.mxu0 0.0
        %1674 = vmatpush2.msra.mxu0 0.0
        %1675 = vmatprep.subr.mxu0 0.0
        %1676 = vmatpush2.msra.mxu0 0.0
        %1677 = vmatprep.mubr.f32.mxu0 0.0
        %1678 = vmatmul.mubr.f32.gmra.mxu0 %v1501
        %v1679 = vpop.f32.mrf.mxu0
        %v1680 = vadd.f32 %v1536, %v1679
        %v1681 = vpop.f32.mrf.mxu0
        %1682 = vmatprep.mubr.f32.mxu0 0.0
        %1683 = vmatmul.mubr.f32.gmra.mxu0 %v1502
        %v1684 = vpop.f32.mrf.mxu0
        %v1685 = vadd.f32 %v1541, %v1684
        %v1686 = vpop.f32.mrf.mxu0
        %1687 = vmatprep.mubr.f32.mxu0 0.0
        %1688 = vmatmul.mubr.f32.gmra.mxu0 %v1503
        %v1689 = vpop.f32.mrf.mxu0
        %v1690 = vadd.f32 %v1546, %v1689
        %v1691 = vpop.f32.mrf.mxu0
        %1692 = vmatprep.mubr.f32.mxu0 0.0
        %1693 = vmatmul.mubr.f32.gmra.mxu0 %v1504
        %v1694 = vpop.f32.mrf.mxu0
        %v1695 = vadd.f32 %v1551, %v1694
        %v1696 = vpop.f32.mrf.mxu0
        %1697 = vmatprep.mubr.f32.mxu0 0.0
        %1698 = vmatmul.mubr.f32.gmra.mxu0 %v1505
        %v1699 = vpop.f32.mrf.mxu0
        %v1700 = vadd.f32 %v1556, %v1699
        %v1701 = vpop.f32.mrf.mxu0
        %1702 = vmatprep.mubr.f32.mxu0 0.0
        %1703 = vmatmul.mubr.f32.gmra.mxu0 %v1506
        %v1704 = vpop.f32.mrf.mxu0
        %v1705 = vadd.f32 %v1561, %v1704
        %v1706 = vpop.f32.mrf.mxu0
        %1707 = vmatprep.mubr.f32.mxu0 0.0
        %1708 = vmatmul.mubr.f32.gmra.mxu0 %v1507
        %v1709 = vpop.f32.mrf.mxu0
        %v1710 = vadd.f32 %v1566, %v1709
        %v1711 = vpop.f32.mrf.mxu0
        %1712 = vmatprep.mubr.f32.mxu0 0.0
        %1713 = vmatmul.mubr.f32.gmra.mxu0 %v1508
        %v1714 = vpop.f32.mrf.mxu0
        %v1715 = vadd.f32 %v1571, %v1714
        %v1716 = vpop.f32.mrf.mxu0
        %1717 = vmatprep.mubr.f32.mxu0 0.0
        %1718 = vmatmul.mubr.f32.gmra.mxu0 %v1509
        %v1719 = vpop.f32.mrf.mxu0
        %v1720 = vadd.f32 %v1576, %v1719
        %v1721 = vpop.f32.mrf.mxu0
        %1722 = vmatprep.mubr.f32.mxu0 0.0
        %1723 = vmatmul.mubr.f32.gmra.mxu0 %v1510
        %v1724 = vpop.f32.mrf.mxu0
        %v1725 = vadd.f32 %v1581, %v1724
        %v1726 = vpop.f32.mrf.mxu0
        %1727 = vmatprep.mubr.f32.mxu0 0.0
        %1728 = vmatmul.mubr.f32.gmra.mxu0 %v1511
        %v1729 = vpop.f32.mrf.mxu0
        %v1730 = vadd.f32 %v1586, %v1729
        %v1731 = vpop.f32.mrf.mxu0
        %1732 = vmatprep.mubr.f32.mxu0 0.0
        %1733 = vmatmul.mubr.f32.gmra.mxu0 %v1512
        %v1734 = vpop.f32.mrf.mxu0
        %v1735 = vadd.f32 %v1591, %v1734
        %v1736 = vpop.f32.mrf.mxu0
        %1737 = vmatprep.mubr.f32.mxu0 0.0
        %1738 = vmatmul.mubr.f32.gmra.mxu0 %v1513
        %v1739 = vpop.f32.mrf.mxu0
        %v1740 = vadd.f32 %v1596, %v1739
        %v1741 = vpop.f32.mrf.mxu0
        %1742 = vmatprep.mubr.f32.mxu0 0.0
        %1743 = vmatmul.mubr.f32.gmra.mxu0 %v1514
        %v1744 = vpop.f32.mrf.mxu0
        %v1745 = vadd.f32 %v1601, %v1744
        %v1746 = vpop.f32.mrf.mxu0
        %1747 = vmatprep.mubr.f32.mxu0 0.0
        %1748 = vmatmul.mubr.f32.gmra.mxu0 %v1515
        %v1749 = vpop.f32.mrf.mxu0
        %v1750 = vadd.f32 %v1606, %v1749
        %v1751 = vpop.f32.mrf.mxu0
        %1752 = vmatprep.mubr.f32.mxu0 0.0
        %1753 = vmatmul.mubr.f32.gmra.mxu0 %v1516
        %v1754 = vpop.f32.mrf.mxu0
        %v1755 = vadd.f32 %v1611, %v1754
        %v1756 = vpop.f32.mrf.mxu0
        %1757 = vdwg.mxu0
        %v1758 = vxor.u32 %v1680, 2147483648
        %v1759 = vxor.u32 %v1685, 2147483648
        %v1760 = vxor.u32 %v1690, 2147483648
        %v1761 = vxor.u32 %v1695, 2147483648
        %v1762 = vxor.u32 %v1700, 2147483648
        %v1763 = vxor.u32 %v1705, 2147483648
        %v1764 = vxor.u32 %v1710, 2147483648
        %v1765 = vxor.u32 %v1715, 2147483648
        %v1766 = vxor.u32 %v1720, 2147483648
        %v1767 = vxor.u32 %v1725, 2147483648
        %v1768 = vxor.u32 %v1730, 2147483648
        %v1769 = vxor.u32 %v1735, 2147483648
        %v1770 = vxor.u32 %v1740, 2147483648
        %v1771 = vxor.u32 %v1745, 2147483648
        %v1772 = vxor.u32 %v1750, 2147483648
        %v1773 = vxor.u32 %v1755, 2147483648
        %v1774 = vmul.f32 %v1758, 1.442695
        %v1775 = vpow.pop %v1774
        %v1776 = vmul.f32 %v1759, 1.442695
        %v1777 = vpow.pop %v1776
        %v1778 = vmul.f32 %v1760, 1.442695
        %v1779 = vpow.pop %v1778
        %v1780 = vmul.f32 %v1761, 1.442695
        %v1781 = vpow.pop %v1780
        %v1782 = vmul.f32 %v1762, 1.442695
        %v1783 = vpow.pop %v1782
        %v1784 = vmul.f32 %v1763, 1.442695
        %v1785 = vpow.pop %v1784
        %v1786 = vmul.f32 %v1764, 1.442695
        %v1787 = vpow.pop %v1786
        %v1788 = vmul.f32 %v1765, 1.442695
        %v1789 = vpow.pop %v1788
        %v1790 = vmul.f32 %v1766, 1.442695
        %v1791 = vpow.pop %v1790
        %v1792 = vmul.f32 %v1767, 1.442695
        %v1793 = vpow.pop %v1792
        %v1794 = vmul.f32 %v1768, 1.442695
        %v1795 = vpow.pop %v1794
        %v1796 = vmul.f32 %v1769, 1.442695
        %v1797 = vpow.pop %v1796
        %v1798 = vmul.f32 %v1770, 1.442695
        %v1799 = vpow.pop %v1798
        %v1800 = vmul.f32 %v1771, 1.442695
        %v1801 = vpow.pop %v1800
        %v1802 = vmul.f32 %v1772, 1.442695
        %v1803 = vpow.pop %v1802
        %v1804 = vmul.f32 %v1773, 1.442695
        %v1805 = vpow.pop %v1804
        %v1806 = vadd.f32 %v1775, 1.0
        %v1807 = vadd.f32 %v1777, 1.0
        %v1808 = vadd.f32 %v1779, 1.0
        %v1809 = vadd.f32 %v1781, 1.0
        %v1810 = vadd.f32 %v1783, 1.0
        %v1811 = vadd.f32 %v1785, 1.0
        %v1812 = vadd.f32 %v1787, 1.0
        %v1813 = vadd.f32 %v1789, 1.0
        %v1814 = vadd.f32 %v1791, 1.0
        %v1815 = vadd.f32 %v1793, 1.0
        %v1816 = vadd.f32 %v1795, 1.0
        %v1817 = vadd.f32 %v1797, 1.0
        %v1818 = vadd.f32 %v1799, 1.0
        %v1819 = vadd.f32 %v1801, 1.0
        %v1820 = vadd.f32 %v1803, 1.0
        %v1821 = vadd.f32 %v1805, 1.0
        %v1822 = vrcp.pop %v1806
        %v1823 = vmul.f32 1.0, %v1822
        %v1824 = vrcp.pop %v1807
        %v1825 = vmul.f32 1.0, %v1824
        %v1826 = vrcp.pop %v1808
        %v1827 = vmul.f32 1.0, %v1826
        %v1828 = vrcp.pop %v1809
        %v1829 = vmul.f32 1.0, %v1828
        %v1830 = vrcp.pop %v1810
        %v1831 = vmul.f32 1.0, %v1830
        %v1832 = vrcp.pop %v1811
        %v1833 = vmul.f32 1.0, %v1832
        %v1834 = vrcp.pop %v1812
        %v1835 = vmul.f32 1.0, %v1834
        %v1836 = vrcp.pop %v1813
        %v1837 = vmul.f32 1.0, %v1836
        %v1838 = vrcp.pop %v1814
        %v1839 = vmul.f32 1.0, %v1838
        %v1840 = vrcp.pop %v1815
        %v1841 = vmul.f32 1.0, %v1840
        %v1842 = vrcp.pop %v1816
        %v1843 = vmul.f32 1.0, %v1842
        %v1844 = vrcp.pop %v1817
        %v1845 = vmul.f32 1.0, %v1844
        %v1846 = vrcp.pop %v1818
        %v1847 = vmul.f32 1.0, %v1846
        %v1848 = vrcp.pop %v1819
        %v1849 = vmul.f32 1.0, %v1848
        %v1850 = vrcp.pop %v1820
        %v1851 = vmul.f32 1.0, %v1850
        %v1852 = vrcp.pop %v1821
        %v1853 = vmul.f32 1.0, %v1852
        %v1854 = vmul.f32 %v1485, %v1823
        %v1855 = vmul.f32 %v1486, %v1825
        %v1856 = vmul.f32 %v1487, %v1827
        %v1857 = vmul.f32 %v1488, %v1829
        %v1858 = vmul.f32 %v1489, %v1831
        %v1859 = vmul.f32 %v1490, %v1833
        %v1860 = vmul.f32 %v1491, %v1835
        %v1861 = vmul.f32 %v1492, %v1837
        %v1862 = vmul.f32 %v1493, %v1839
        %v1863 = vmul.f32 %v1494, %v1841
        %v1864 = vmul.f32 %v1495, %v1843
        %v1865 = vmul.f32 %v1496, %v1845
        %v1866 = vmul.f32 %v1497, %v1847
        %v1867 = vmul.f32 %v1498, %v1849
        %v1868 = vmul.f32 %v1499, %v1851
        %v1869 = vmul.f32 %v1500, %v1853
        %v1870 = vld [vmem:[%s7] sm:$0xff]
        %v1871 = vld [vmem:[%s8] sm:$0xff]
        %1873 = vset.pattern.permute.xlu0 0
        %1874 = vperm.xlu0 %1873, %v1871
        %v1875 = vpop.permute.xlu0 %1874
        %1877 = vmatprep.subr.mxu0 0.0
        %1878 = vmatpush1.msra.mxu0 %v1869
        %1879 = vmatprep.subr.mxu0 0.0
        %1880 = vmatpush1.msra.mxu0 %v1868
        %1881 = vmatprep.subr.mxu0 0.0
        %1882 = vmatpush1.msra.mxu0 %v1867
        %1883 = vmatprep.subr.mxu0 0.0
        %1884 = vmatpush1.msra.mxu0 %v1866
        %1885 = vmatprep.subr.mxu0 0.0
        %1886 = vmatpush1.msra.mxu0 %v1865
        %1887 = vmatprep.subr.mxu0 0.0
        %1888 = vmatpush1.msra.mxu0 %v1864
        %1889 = vmatprep.subr.mxu0 0.0
        %1890 = vmatpush1.msra.mxu0 %v1863
        %1891 = vmatprep.subr.mxu0 0.0
        %1892 = vmatpush1.msra.mxu0 %v1862
        %1893 = vmatprep.subr.mxu0 0.0
        %1894 = vmatpush1.msra.mxu0 %v1861
        %1895 = vmatprep.subr.mxu0 0.0
        %1896 = vmatpush1.msra.mxu0 %v1860
        %1897 = vmatprep.subr.mxu0 0.0
        %1898 = vmatpush1.msra.mxu0 %v1859
        %1899 = vmatprep.subr.mxu0 0.0
        %1900 = vmatpush1.msra.mxu0 %v1858
        %1901 = vmatprep.subr.mxu0 0.0
        %1902 = vmatpush1.msra.mxu0 %v1857
        %1903 = vmatprep.subr.mxu0 0.0
        %1904 = vmatpush1.msra.mxu0 %v1856
        %1905 = vmatprep.subr.mxu0 0.0
        %1906 = vmatpush1.msra.mxu0 %v1855
        %1907 = vmatprep.subr.mxu0 0.0
        %1908 = vmatpush1.msra.mxu0 %v1854
        %1909 = vmatprep.subr.mxu0 0.0
        %1910 = vmatpush2.msra.mxu0 0.0
        %1911 = vmatprep.subr.mxu0 0.0
        %1912 = vmatpush2.msra.mxu0 0.0
        %1913 = vmatprep.subr.mxu0 0.0
        %1914 = vmatpush2.msra.mxu0 0.0
        %1915 = vmatprep.subr.mxu0 0.0
        %1916 = vmatpush2.msra.mxu0 0.0
        %1917 = vmatprep.subr.mxu0 0.0
        %1918 = vmatpush2.msra.mxu0 0.0
        %1919 = vmatprep.subr.mxu0 0.0
        %1920 = vmatpush2.msra.mxu0 0.0
        %1921 = vmatprep.subr.mxu0 0.0
        %1922 = vmatpush2.msra.mxu0 0.0
        %1923 = vmatprep.subr.mxu0 0.0
        %1924 = vmatpush2.msra.mxu0 0.0
        %1925 = vmatprep.subr.mxu0 0.0
        %1926 = vmatpush2.msra.mxu0 0.0
        %1927 = vmatprep.subr.mxu0 0.0
        %1928 = vmatpush2.msra.mxu0 0.0
        %1929 = vmatprep.subr.mxu0 0.0
        %1930 = vmatpush2.msra.mxu0 0.0
        %1931 = vmatprep.subr.mxu0 0.0
        %1932 = vmatpush2.msra.mxu0 0.0
        %1933 = vmatprep.subr.mxu0 0.0
        %1934 = vmatpush2.msra.mxu0 0.0
        %1935 = vmatprep.subr.mxu0 0.0
        %1936 = vmatpush2.msra.mxu0 0.0
        %1937 = vmatprep.subr.mxu0 0.0
        %1938 = vmatpush2.msra.mxu0 0.0
        %1939 = vmatprep.subr.mxu0 0.0
        %1940 = vmatpush2.msra.mxu0 0.0
        %1941 = vmatprep.mubr.f32.mxu0 0.0
        %1942 = vmatmul.mubr.f32.gmra.mxu0 %v1870
        %v1943 = vpop.f32.mrf.mxu0
        %v1944 = vadd.f32 %v1875, %v1943
        %v1945 = vpop.f32.mrf.mxu0
        %1946 = vdwg.mxu0
        %v1947 = vsub.f32 %v1208, %v1944
        %v1948 = vsub.f32 0.0, %v1944
        %v1949 = vmul.f32 %v1948, 1.442695
        %v1950 = vpow.pop %v1949
        %v1952 = vrot.slane %v1950, 4
        %v1954 = vmul.f32 %v1947, %v1952
        %v1955 = vsel %vm1133, %v1208, %v1954
        %v1956 = vld [vmem:[%s2] sm:$0xff]
        %v1958 = vsel %vm1137, %v1956, 0
        %1960 = vmatprep.subr.mxu0 0.0
        %1961 = vmatpush1.msra.mxu0 0.0
        %1962 = vmatprep.subr.mxu0 0.0
        %1963 = vmatpush1.msra.mxu0 0.0
        %1964 = vmatprep.subr.mxu0 0.0
        %1965 = vmatpush1.msra.mxu0 0.0
        %1966 = vmatprep.subr.mxu0 0.0
        %1967 = vmatpush1.msra.mxu0 0.0
        %1968 = vmatprep.subr.mxu0 0.0
        %1969 = vmatpush1.msra.mxu0 0.0
        %1970 = vmatprep.subr.mxu0 0.0
        %1971 = vmatpush1.msra.mxu0 0.0
        %1972 = vmatprep.subr.mxu0 0.0
        %1973 = vmatpush1.msra.mxu0 0.0
        %1974 = vmatprep.subr.mxu0 0.0
        %1975 = vmatpush1.msra.mxu0 0.0
        %1976 = vmatprep.subr.mxu0 0.0
        %1977 = vmatpush1.msra.mxu0 0.0
        %1978 = vmatprep.subr.mxu0 0.0
        %1979 = vmatpush1.msra.mxu0 0.0
        %1980 = vmatprep.subr.mxu0 0.0
        %1981 = vmatpush1.msra.mxu0 0.0
        %1982 = vmatprep.subr.mxu0 0.0
        %1983 = vmatpush1.msra.mxu0 0.0
        %1984 = vmatprep.subr.mxu0 0.0
        %1985 = vmatpush1.msra.mxu0 0.0
        %1986 = vmatprep.subr.mxu0 0.0
        %1987 = vmatpush1.msra.mxu0 0.0
        %1988 = vmatprep.subr.mxu0 0.0
        %1989 = vmatpush1.msra.mxu0 0.0
        %1990 = vmatprep.subr.mxu0 0.0
        %1991 = vmatpush1.msra.mxu0 %v1955
        %1992 = vmatprep.subr.mxu0 0.0
        %1993 = vmatpush2.msra.mxu0 0.0
        %1994 = vmatprep.subr.mxu0 0.0
        %1995 = vmatpush2.msra.mxu0 0.0
        %1996 = vmatprep.subr.mxu0 0.0
        %1997 = vmatpush2.msra.mxu0 0.0
        %1998 = vmatprep.subr.mxu0 0.0
        %1999 = vmatpush2.msra.mxu0 0.0
        %2000 = vmatprep.subr.mxu0 0.0
        %2001 = vmatpush2.msra.mxu0 0.0
        %2002 = vmatprep.subr.mxu0 0.0
        %2003 = vmatpush2.msra.mxu0 0.0
        %2004 = vmatprep.subr.mxu0 0.0
        %2005 = vmatpush2.msra.mxu0 0.0
        %2006 = vmatprep.subr.mxu0 0.0
        %2007 = vmatpush2.msra.mxu0 0.0
        %2008 = vmatprep.subr.mxu0 0.0
        %2009 = vmatpush2.msra.mxu0 0.0
        %2010 = vmatprep.subr.mxu0 0.0
        %2011 = vmatpush2.msra.mxu0 0.0
        %2012 = vmatprep.subr.mxu0 0.0
        %2013 = vmatpush2.msra.mxu0 0.0
        %2014 = vmatprep.subr.mxu0 0.0
        %2015 = vmatpush2.msra.mxu0 0.0
        %2016 = vmatprep.subr.mxu0 0.0
        %2017 = vmatpush2.msra.mxu0 0.0
        %2018 = vmatprep.subr.mxu0 0.0
        %2019 = vmatpush2.msra.mxu0 0.0
        %2020 = vmatprep.subr.mxu0 0.0
        %2021 = vmatpush2.msra.mxu0 0.0
        %2022 = vmatprep.subr.mxu0 0.0
        %2023 = vmatpush2.msra.mxu0 0.0
        %2024 = vmatprep.mubr.f32.mxu0 0.0
        %2025 = vmatmul.mubr.f32.gmra.mxu0 %v1958
        %v2026 = vpop.f32.mrf.mxu0
        %v2027 = vadd.f32 0.0, %v2026
        %v2028 = vpop.f32.mrf.mxu0
        %2029 = vdwg.mxu0
        %2030 = vst.msk [vmem:[%s338] sm:$0xff] %vm364, %v2027
        %s2031 = sand.u32 %s230, 1
        %s2032 = scalar_lea.sflag [#allocation4], %s2031
        %s2033 = sand.u32 %s230, 1
        %s2034 = smul.addr %s2033, 8
        %s2035 = scalar_lea.vmem [#allocation3], %s2034
        // Predicated region
        $region57: #{tpu_custom_call.1} parent=55 // pred_check
          %p2036 = pneg %p240
        $region58: #{tpu_custom_call.1} parent=55 // pred_check_branch
          %2038 = sbr.rel (%p2036) target = $region60
        $region59: #{tpu_custom_call.1} parent=55 // pred_region
          %s2040 = ssub.s32 128, 128
          %2041 = vsyncadd %s2032, %s2040
          %s2042 = smul.addr %s23, 128
          %s2043 = scalar_lea.hbm %s9, %s2042
          %s2045 = sshll.u32 %s2035, 4
          %s2046 = int_to_ptr.vmem [resolvable:$true] %s2045
          %2048 = dma.vmem_to_hbm [thread:$0]  %s2046, 128, %s2043, %s2032
        $region60: #{tpu_custom_call.1} parent=55 // pred_fallthru
          _
      $region56: #{tpu_custom_call.1} parent=5 // pred_fallthru
        _
      %p2049 = scmp.le.s32.totalorder 2, %s18
      // Predicated region
      $region61: #{tpu_custom_call.1} parent=5 // pred_check
        %p2050 = pneg %p2049
      $region62: #{tpu_custom_call.1} parent=5 // pred_check_branch
        %2052 = sbr.rel (%p2050) target = $region64
      $region63: #{tpu_custom_call.1} parent=5 // pred_region
        %s2053 = ssub.s32 %s18, 2
        // Predicated region
        $region65: #{tpu_custom_call.1} parent=63 // pred_check
          %p2054 = pneg %p246
        $region66: #{tpu_custom_call.1} parent=63 // pred_check_branch
          %2056 = sbr.rel (%p2054) target = $region68
        $region67: #{tpu_custom_call.1} parent=63 // pred_region
          %s2057 = sand.u32 %s231, 1
          %s2058 = scalar_lea.sflag [#allocation4], %s2057
          %s2059 = sand.u32 %s231, 1
          %s2060 = smul.addr %s2059, 8
          %s2061 = scalar_lea.vmem [#allocation3], %s2060
          %2062 = dma.done %s2058, 128
        $region68: #{tpu_custom_call.1} parent=63 // pred_fallthru
          _
      $region64: #{tpu_custom_call.1} parent=5 // pred_fallthru
        _
    $region6: #{tpu_custom_call.1} parent=1 // loop_footer
      %s22 = sadd.s32 1, %s18
    $region7: #{tpu_custom_call.1} parent=1 // loop_footer_branch
      %17 = sbr.rel target = $region3
    $region8: #{tpu_custom_call.1} parent=1 // loop_exit
      _
    %2063 = vsyncpa [#allocation4], 1
    %s2064 = scalar_lea.sflag [#allocation4], 1
    %2065 = vsyncpa %s2064, 1

</llo_original>
